<compile_context>
chip_gen: v6e
topology: v6e:2x2x1
jax: 0.10.0
libtpu: 0.0.40
codegen_flags: <defaults>
</compile_context>

<pallas_src>
import functools

import jax
import jax.numpy as jnp
from jax import lax
from jax.experimental import pallas as pl
from jax.experimental.pallas import tpu as pltpu


def _convlstm3d_kernel(x_ref, w_ref, b_ref, c_ref, h_out_ref, c_out_ref,
                       acc_ref, *, H, W, Kh, Kw, ph, pw, hid):
    """One grid step = (batch b, output depth-plane d, depth tap kd).

    x_ref    : (1, 1, Cp, Lp)        bf16 padded input plane at depth d+kd
    w_ref    : (1, Kh*Kw, 4*hid, Cp) bf16 weight slab for this kd
    b_ref    : (4*hid, 1)            f32 bias
    c_ref    : (1, 1, hid, H*W)      current cell state plane
    h_out_ref, c_out_ref : (1, 1, hid, H*W)
    acc_ref  : (4*hid, H*W)          f32 gate accumulator (lives across kd)
    """
    kd = pl.program_id(2)
    HW = H * W

    @pl.when(kd == 0)
    def _init():
        acc_ref[...] = jnp.zeros_like(acc_ref)

    x = x_ref[0, 0]                                        # (Cp, Lp)
    # w-coordinate of every output lane, for masking the W-boundary wrap.
    wcol = lax.broadcasted_iota(jnp.int32, (1, HW), 1) % W

    acc = acc_ref[...]
    for kh in range(Kh):
        for kw in range(Kw):
            s = kh * W + kw                                # static lane offset
            x_tap = x[:, s:s + HW]                         # (Cp, HW)
            dw = kw - pw
            if dw != 0:
                valid = jnp.logical_and(wcol + dw >= 0, wcol + dw < W)
                x_tap = jnp.where(valid, x_tap, jnp.zeros_like(x_tap))
            w_tap = w_ref[0, kh * Kw + kw]                 # (4*hid, Cp)
            acc = acc + jnp.dot(w_tap, x_tap,
                                preferred_element_type=jnp.float32)
    acc_ref[...] = acc

    @pl.when(kd == pl.num_programs(2) - 1)
    def _finalize():
        gates = acc_ref[...] + b_ref[...]                  # (4*hid, HW) f32
        i = jax.nn.sigmoid(gates[0 * hid:1 * hid])
        f = jax.nn.sigmoid(gates[1 * hid:2 * hid])
        o = jax.nn.sigmoid(gates[2 * hid:3 * hid])
        g = jnp.tanh(gates[3 * hid:4 * hid])
        c_cur = c_ref[0, 0].astype(jnp.float32)            # (hid, HW)
        c_next = f * c_cur + i * g
        h_next = o * jnp.tanh(c_next)
        c_out_ref[0, 0] = c_next.astype(c_out_ref.dtype)
        h_out_ref[0, 0] = h_next.astype(h_out_ref.dtype)


def conv_lstm_cell_3d(x, h_cur, c_cur, weight, bias, *,
                      compute_dtype=jnp.bfloat16):
    """ConvLSTM 3-D cell forward (matches PyTorch ConvLSTMCell_3D.forward).

    x      : (B, Cin, D, H, W)              NCDHW
    h_cur  : (B, hid, D, H, W)
    c_cur  : (B, hid, D, H, W)
    weight : (4*hid, Cin+hid, Kd, Kh, Kw)   PyTorch Conv3d layout
    bias   : (4*hid,)
    returns (h_next, c_next) in NCDHW; h_next in h_cur.dtype, c_next in
    c_cur.dtype (so an f32 cell state stays f32).
    """
    B, Cin, D, H, W = x.shape
    hid = h_cur.shape[1]
    O, Ctot, Kd, Kh, Kw = weight.shape
    assert O == 4 * hid and Ctot == Cin + hid
    assert Kd % 2 == 1 and Kh % 2 == 1 and Kw % 2 == 1, "odd 'same' kernels only"
    pd, ph, pw = Kd // 2, Kh // 2, Kw // 2
    HW = H * W
    Lp = (H + 2 * ph) * W + 2 * pw

    # Pad the channel dim to a sublane-friendly multiple (zeros -> no-op math).
    mult = 16 if jnp.dtype(compute_dtype).itemsize <= 2 else 8
    Cp = ((Ctot + mult - 1) // mult) * mult

    # --- layout plumbing (all at original data size; no HBM im2col) -------
    cmb = jnp.concatenate([x, h_cur], axis=1).astype(compute_dtype)   # (B,Ctot,D,H,W)
    cmb = jnp.pad(cmb, ((0, 0), (0, 0), (pd, pd), (ph, ph), (0, 0)))  # zero halo D,H
    cmb = jnp.transpose(cmb, (0, 2, 1, 3, 4))                         # (B,Dp,Ctot,Hp,W)
    cmb = cmb.reshape(B, D + 2 * pd, Ctot, (H + 2 * ph) * W)
    cmb = jnp.pad(cmb, ((0, 0), (0, 0), (0, Cp - Ctot), (pw, pw)))    # (B,Dp,Cp,Lp)

    wr = jnp.transpose(weight, (2, 3, 4, 0, 1)).astype(compute_dtype) # (Kd,Kh,Kw,4h,Ctot)
    wr = wr.reshape(Kd, Kh * Kw, 4 * hid, Ctot)
    wr = jnp.pad(wr, ((0, 0), (0, 0), (0, 0), (0, Cp - Ctot)))        # (Kd,KhKw,4h,Cp)
    br = bias.astype(jnp.float32).reshape(4 * hid, 1)

    c_cm = jnp.transpose(c_cur, (0, 2, 1, 3, 4)).reshape(B, D, hid, HW)

    kernel = functools.partial(_convlstm3d_kernel, H=H, W=W, Kh=Kh, Kw=Kw,
                               ph=ph, pw=pw, hid=hid)

    # Per-step VMEM footprint is tiny (a few KiB of blocks + the f32 gate
    # accumulator), so no vmem_limit_bytes override is needed on any of
    # v5e / v6e / v7x; B*D parallel steps shard across v7x's two TensorCores.
    h_cm, c_next_cm = pl.pallas_call(
        kernel,
        out_shape=(jax.ShapeDtypeStruct((B, D, hid, HW), h_cur.dtype),
                   jax.ShapeDtypeStruct((B, D, hid, HW), c_cur.dtype)),
        grid=(B, D, Kd),
        in_specs=[
            # one padded depth-plane at depth d+kd (D axis was zero-padded by pd)
            pl.BlockSpec((1, 1, Cp, Lp), lambda b, d, kd: (b, d + kd, 0, 0)),
            # the kd slab of the weight
            pl.BlockSpec((1, Kh * Kw, 4 * hid, Cp), lambda b, d, kd: (kd, 0, 0, 0)),
            # bias (resident)
            pl.BlockSpec((4 * hid, 1), lambda b, d, kd: (0, 0)),
            # current cell-state plane (block index constant along kd)
            pl.BlockSpec((1, 1, hid, HW), lambda b, d, kd: (b, d, 0, 0)),
        ],
        out_specs=(
            pl.BlockSpec((1, 1, hid, HW), lambda b, d, kd: (b, d, 0, 0)),
            pl.BlockSpec((1, 1, hid, HW), lambda b, d, kd: (b, d, 0, 0)),
        ),
        scratch_shapes=[pltpu.VMEM((4 * hid, HW), jnp.float32)],
        compiler_params=pltpu.CompilerParams(
            dimension_semantics=("parallel", "parallel", "arbitrary")),
    )(cmb, wr, br, c_cm)

    h_next = h_cm.reshape(B, D, hid, H, W).transpose(0, 2, 1, 3, 4)
    c_next = c_next_cm.reshape(B, D, hid, H, W).transpose(0, 2, 1, 3, 4)
    return h_next, c_next


def _reference(x, h_cur, c_cur, weight, bias, conv_dtype=jnp.float32):
    """Pure-JAX reference of the PyTorch forward (NCDHW).

    `conv_dtype` lets the reference use the same bf16 matmul operands as the
    kernel (f32 accumulation), so the comparison isolates kernel bugs from the
    intentional bf16 quantization of the conv inputs.
    """
    combined = jnp.concatenate([x, h_cur], axis=1).astype(conv_dtype)
    conv = lax.conv_general_dilated(
        combined, weight.astype(conv_dtype),
        window_strides=(1, 1, 1), padding="SAME",
        dimension_numbers=("NCDHW", "OIDHW", "NCDHW"),
        preferred_element_type=jnp.float32)
    conv = conv + bias.astype(jnp.float32).reshape(1, -1, 1, 1, 1)
    hid = h_cur.shape[1]
    cc_i, cc_f, cc_o, cc_g = jnp.split(conv, 4, axis=1)
    i = jax.nn.sigmoid(cc_i)
    f = jax.nn.sigmoid(cc_f)
    o = jax.nn.sigmoid(cc_o)
    g = jnp.tanh(cc_g)
    c_next = f * c_cur.astype(jnp.float32) + i * g
    h_next = o * jnp.tanh(c_next)
    return h_next, c_next


if __name__ == "__main__":
    # Small shapes consistent with the module's forward:
    # batch=2, input_dim=4, hidden_dim=8, spatial (D,H,W)=(4,16,16), kernel 3x3x3.
    B, Cin, hid = 2, 4, 8
    D, H, W = 4, 16, 16
    Kd = Kh = Kw = 3

    key = jax.random.PRNGKey(0)
    k1, k2, k3, k4, k5 = jax.random.split(key, 5)
    x = jax.random.normal(k1, (B, Cin, D, H, W), jnp.float32)
    h0 = jax.random.normal(k2, (B, hid, D, H, W), jnp.float32)
    c0 = jax.random.normal(k3, (B, hid, D, H, W), jnp.float32)
    weight = 0.1 * jax.random.normal(k4, (4 * hid, Cin + hid, Kd, Kh, Kw),
                                     jnp.float32)
    bias = 0.1 * jax.random.normal(k5, (4 * hid,), jnp.float32)

    h_next, c_next = jax.jit(conv_lstm_cell_3d)(x, h0, c0, weight, bias)
    jax.block_until_ready((h_next, c_next))

    # Reference uses the same bf16 conv operands (f32 accumulation), so the
    # only expected differences are summation order / transcendental ulps.
    h_ref, c_ref = _reference(x, h0, c0, weight, bias, conv_dtype=jnp.bfloat16)
    assert h_next.shape == (B, hid, D, H, W) and c_next.shape == (B, hid, D, H, W)
    assert jnp.allclose(h_next, h_ref, atol=1e-2, rtol=1e-2)
    assert jnp.allclose(c_next, c_ref, atol=1e-2, rtol=1e-2)
    print("KERNEL_OK")
</pallas_src>

<mosaic_0001>
module attributes {stable_mosaic.version = 11 : i64} {
  func.func @_convlstm3d_kernel(%arg0: i32, %arg1: i32, %arg2: i32, %arg3: memref<1x1x16x290xbf16, #tpu.memory_space<vmem>>, %arg4: memref<1x9x32x16xbf16, #tpu.memory_space<vmem>>, %arg5: memref<32x1xf32, #tpu.memory_space<vmem>>, %arg6: memref<1x1x8x256xf32, #tpu.memory_space<vmem>>, %arg7: memref<1x1x8x256xf32, #tpu.memory_space<vmem>>, %arg8: memref<1x1x8x256xf32, #tpu.memory_space<vmem>>, %arg9: memref<32x256xf32, #tpu.memory_space<vmem>>) attributes {dimension_semantics = [#tpu.dimension_semantics<parallel>, #tpu.dimension_semantics<parallel>, #tpu.dimension_semantics<arbitrary>], iteration_bounds = array<i64: 2, 4, 3>, scalar_prefetch = 0 : i64, scratch_operands = 1 : i64, tpu.core_type = #tpu.core_type<tc>, window_params = [{transform_indices = @transform_0, window_bounds = array<i64: 1, 1, 16, 290>}, {transform_indices = @transform_1, window_bounds = array<i64: 1, 9, 32, 16>}, {pipeline_mode = #tpu.pipeline_mode<synchronous>, transform_indices = @transform_2, window_bounds = array<i64: 32, 1>}, {transform_indices = @transform_3, window_bounds = array<i64: 1, 1, 8, 256>}, {transform_indices = @transform_4, window_bounds = array<i64: 1, 1, 8, 256>}, {transform_indices = @transform_5, window_bounds = array<i64: 1, 1, 8, 256>}]} {
    %c0_i32 = arith.constant 0 : i32
    %0 = arith.cmpi eq, %arg2, %c0_i32 : i32
    %1 = arith.extui %0 : i1 to i32
    %c0_i32_0 = arith.constant 0 : i32
    %2 = arith.cmpi ne, %1, %c0_i32_0 : i32
    scf.if %2 {
      %cst_78 = arith.constant 0.000000e+00 : f32
      %150 = vector.broadcast %cst_78 : f32 to vector<32x256xf32>
      %c0_79 = arith.constant 0 : index
      %c0_80 = arith.constant 0 : index
      %151 = vector.load %arg9[%c0_79, %c0_80] : memref<32x256xf32, #tpu.memory_space<vmem>>, vector<32x256xf32>
      tpu.vector_store %arg9[%c0_79, %c0_80], %150 {strides = array<i32>} : memref<32x256xf32, #tpu.memory_space<vmem>>, vector<32x256xf32>,
    } else {
    }
    %c0 = arith.constant 0 : index
    %c0_1 = arith.constant 0 : index
    %c0_2 = arith.constant 0 : index
    %c0_3 = arith.constant 0 : index
    %3 = vector.load %arg3[%c0, %c0_1, %c0_2, %c0_3] : memref<1x1x16x290xbf16, #tpu.memory_space<vmem>>, vector<1x1x16x290xbf16>
    %4 = vector.shape_cast %3 : vector<1x1x16x290xbf16> to vector<16x290xbf16>
    %5 = tpu.iota {dimensions = array<i32: 1>} : vector<1x256xi32>
    %c16_i32 = arith.constant 16 : i32
    %c0_i32_4 = arith.constant 0 : i32
    %6 = arith.cmpi eq, %c16_i32, %c0_i32_4 : i32
    %c1_i32 = arith.constant 1 : i32
    %7 = arith.select %6, %c1_i32, %c16_i32 : i32
    %8 = vector.broadcast %7 : i32 to vector<1x256xi32>
    %9 = arith.remsi %5, %8 : vector<1x256xi32>
    %c0_i32_5 = arith.constant 0 : i32
    %10 = vector.broadcast %c0_i32_5 : i32 to vector<1x256xi32>
    %11 = arith.cmpi ne, %9, %10 : vector<1x256xi32>
    %c0_i32_6 = arith.constant 0 : i32
    %12 = vector.broadcast %c0_i32_6 : i32 to vector<1x256xi32>
    %13 = arith.cmpi slt, %9, %12 : vector<1x256xi32>
    %c0_i32_7 = arith.constant 0 : i32
    %14 = arith.cmpi slt, %7, %c0_i32_7 : i32
    %15 = vector.broadcast %14 : i1 to vector<1x256xi1>
    %16 = vector.broadcast %15 : vector<1x256xi1> to vector<1x256xi1>
    %17 = arith.xori %13, %16 : vector<1x256xi1>
    %18 = arith.andi %17, %11 : vector<1x256xi1>
    %19 = vector.broadcast %7 : i32 to vector<1x256xi32>
    %20 = arith.addi %9, %19 : vector<1x256xi32>
    %21 = arith.select %18, %20, %9 : vector<1x256xi1>, vector<1x256xi32>
    %c0_8 = arith.constant 0 : index
    %c0_9 = arith.constant 0 : index
    %22 = vector.load %arg9[%c0_8, %c0_9] : memref<32x256xf32, #tpu.memory_space<vmem>>, vector<32x256xf32>
    %23 = vector.extract_strided_slice %4 {offsets = [0, 0], sizes = [16, 256], strides = [1, 1]} : vector<16x290xbf16> to vector<16x256xbf16>
    %c-1_i32 = arith.constant -1 : i32
    %24 = vector.broadcast %c-1_i32 : i32 to vector<1x256xi32>
    %25 = arith.addi %21, %24 : vector<1x256xi32>
    %c0_i32_10 = arith.constant 0 : i32
    %26 = vector.broadcast %c0_i32_10 : i32 to vector<1x256xi32>
    %27 = arith.cmpi sge, %25, %26 : vector<1x256xi32>
    %c-1_i32_11 = arith.constant -1 : i32
    %28 = vector.broadcast %c-1_i32_11 : i32 to vector<1x256xi32>
    %29 = arith.addi %21, %28 : vector<1x256xi32>
    %c16_i32_12 = arith.constant 16 : i32
    %30 = vector.broadcast %c16_i32_12 : i32 to vector<1x256xi32>
    %31 = arith.cmpi slt, %29, %30 : vector<1x256xi32>
    %32 = arith.andi %27, %31 : vector<1x256xi1>
    %cst = arith.constant 0.000000e+00 : bf16
    %33 = vector.broadcast %cst : bf16 to vector<16x256xbf16>
    %34 = vector.shape_cast %32 : vector<1x256xi1> to vector<1x256xi1>
    %35 = vector.broadcast %34 : vector<1x256xi1> to vector<16x256xi1>
    %36 = arith.select %35, %23, %33 : vector<16x256xi1>, vector<16x256xbf16>
    %c0_13 = arith.constant 0 : index
    %c0_14 = arith.constant 0 : index
    %c0_15 = arith.constant 0 : index
    %c0_16 = arith.constant 0 : index
    %37 = vector.load %arg4[%c0_13, %c0_14, %c0_15, %c0_16] : memref<1x9x32x16xbf16, #tpu.memory_space<vmem>>, vector<1x1x32x16xbf16>
    %38 = vector.shape_cast %37 : vector<1x1x32x16xbf16> to vector<32x16xbf16>
    %cst_17 = arith.constant dense<0.000000e+00> : vector<32x256xf32>
    %39 = tpu.matmul %38, %36, %cst_17 {dimension_numbers = #tpu.dot_dimension_numbers<[1], [0], [0], [1], [0, 0, 1, 1], [], []>} : vector<32x16xbf16>, vector<16x256xbf16>, vector<32x256xf32> -> vector<32x256xf32>
    %40 = arith.addf %22, %39 : vector<32x256xf32>
    %41 = vector.extract_strided_slice %4 {offsets = [0, 1], sizes = [16, 256], strides = [1, 1]} : vector<16x290xbf16> to vector<16x256xbf16>
    %c0_18 = arith.constant 0 : index
    %c1 = arith.constant 1 : index
    %c0_19 = arith.constant 0 : index
    %c0_20 = arith.constant 0 : index
    %42 = vector.load %arg4[%c0_18, %c1, %c0_19, %c0_20] : memref<1x9x32x16xbf16, #tpu.memory_space<vmem>>, vector<1x1x32x16xbf16>
    %43 = vector.shape_cast %42 : vector<1x1x32x16xbf16> to vector<32x16xbf16>
    %cst_21 = arith.constant dense<0.000000e+00> : vector<32x256xf32>
    %44 = tpu.matmul %43, %41, %cst_21 {dimension_numbers = #tpu.dot_dimension_numbers<[1], [0], [0], [1], [0, 0, 1, 1], [], []>} : vector<32x16xbf16>, vector<16x256xbf16>, vector<32x256xf32> -> vector<32x256xf32>
    %45 = arith.addf %40, %44 : vector<32x256xf32>
    %46 = vector.extract_strided_slice %4 {offsets = [0, 2], sizes = [16, 256], strides = [1, 1]} : vector<16x290xbf16> to vector<16x256xbf16>
    %c1_i32_22 = arith.constant 1 : i32
    %47 = vector.broadcast %c1_i32_22 : i32 to vector<1x256xi32>
    %48 = arith.addi %21, %47 : vector<1x256xi32>
    %c0_i32_23 = arith.constant 0 : i32
    %49 = vector.broadcast %c0_i32_23 : i32 to vector<1x256xi32>
    %50 = arith.cmpi sge, %48, %49 : vector<1x256xi32>
    %c1_i32_24 = arith.constant 1 : i32
    %51 = vector.broadcast %c1_i32_24 : i32 to vector<1x256xi32>
    %52 = arith.addi %21, %51 : vector<1x256xi32>
    %c16_i32_25 = arith.constant 16 : i32
    %53 = vector.broadcast %c16_i32_25 : i32 to vector<1x256xi32>
    %54 = arith.cmpi slt, %52, %53 : vector<1x256xi32>
    %55 = arith.andi %50, %54 : vector<1x256xi1>
    %cst_26 = arith.constant 0.000000e+00 : bf16
    %56 = vector.broadcast %cst_26 : bf16 to vector<16x256xbf16>
    %57 = vector.shape_cast %55 : vector<1x256xi1> to vector<1x256xi1>
    %58 = vector.broadcast %57 : vector<1x256xi1> to vector<16x256xi1>
    %59 = arith.select %58, %46, %56 : vector<16x256xi1>, vector<16x256xbf16>
    %c0_27 = arith.constant 0 : index
    %c2 = arith.constant 2 : index
    %c0_28 = arith.constant 0 : index
    %c0_29 = arith.constant 0 : index
    %60 = vector.load %arg4[%c0_27, %c2, %c0_28, %c0_29] : memref<1x9x32x16xbf16, #tpu.memory_space<vmem>>, vector<1x1x32x16xbf16>
    %61 = vector.shape_cast %60 : vector<1x1x32x16xbf16> to vector<32x16xbf16>
    %cst_30 = arith.constant dense<0.000000e+00> : vector<32x256xf32>
    %62 = tpu.matmul %61, %59, %cst_30 {dimension_numbers = #tpu.dot_dimension_numbers<[1], [0], [0], [1], [0, 0, 1, 1], [], []>} : vector<32x16xbf16>, vector<16x256xbf16>, vector<32x256xf32> -> vector<32x256xf32>
    %63 = arith.addf %45, %62 : vector<32x256xf32>
    %64 = vector.extract_strided_slice %4 {offsets = [0, 16], sizes = [16, 256], strides = [1, 1]} : vector<16x290xbf16> to vector<16x256xbf16>
    %c-1_i32_31 = arith.constant -1 : i32
    %65 = vector.broadcast %c-1_i32_31 : i32 to vector<1x256xi32>
    %66 = arith.addi %21, %65 : vector<1x256xi32>
    %c0_i32_32 = arith.constant 0 : i32
    %67 = vector.broadcast %c0_i32_32 : i32 to vector<1x256xi32>
    %68 = arith.cmpi sge, %66, %67 : vector<1x256xi32>
    %c-1_i32_33 = arith.constant -1 : i32
    %69 = vector.broadcast %c-1_i32_33 : i32 to vector<1x256xi32>
    %70 = arith.addi %21, %69 : vector<1x256xi32>
    %c16_i32_34 = arith.constant 16 : i32
    %71 = vector.broadcast %c16_i32_34 : i32 to vector<1x256xi32>
    %72 = arith.cmpi slt, %70, %71 : vector<1x256xi32>
    %73 = arith.andi %68, %72 : vector<1x256xi1>
    %cst_35 = arith.constant 0.000000e+00 : bf16
    %74 = vector.broadcast %cst_35 : bf16 to vector<16x256xbf16>
    %75 = vector.shape_cast %73 : vector<1x256xi1> to vector<1x256xi1>
    %76 = vector.broadcast %75 : vector<1x256xi1> to vector<16x256xi1>
    %77 = arith.select %76, %64, %74 : vector<16x256xi1>, vector<16x256xbf16>
    %c0_36 = arith.constant 0 : index
    %c3 = arith.constant 3 : index
    %c0_37 = arith.constant 0 : index
    %c0_38 = arith.constant 0 : index
    %78 = vector.load %arg4[%c0_36, %c3, %c0_37, %c0_38] : memref<1x9x32x16xbf16, #tpu.memory_space<vmem>>, vector<1x1x32x16xbf16>
    %79 = vector.shape_cast %78 : vector<1x1x32x16xbf16> to vector<32x16xbf16>
    %cst_39 = arith.constant dense<0.000000e+00> : vector<32x256xf32>
    %80 = tpu.matmul %79, %77, %cst_39 {dimension_numbers = #tpu.dot_dimension_numbers<[1], [0], [0], [1], [0, 0, 1, 1], [], []>} : vector<32x16xbf16>, vector<16x256xbf16>, vector<32x256xf32> -> vector<32x256xf32>
    %81 = arith.addf %63, %80 : vector<32x256xf32>
    %82 = vector.extract_strided_slice %4 {offsets = [0, 17], sizes = [16, 256], strides = [1, 1]} : vector<16x290xbf16> to vector<16x256xbf16>
    %c0_40 = arith.constant 0 : index
    %c4 = arith.constant 4 : index
    %c0_41 = arith.constant 0 : index
    %c0_42 = arith.constant 0 : index
    %83 = vector.load %arg4[%c0_40, %c4, %c0_41, %c0_42] : memref<1x9x32x16xbf16, #tpu.memory_space<vmem>>, vector<1x1x32x16xbf16>
    %84 = vector.shape_cast %83 : vector<1x1x32x16xbf16> to vector<32x16xbf16>
    %cst_43 = arith.constant dense<0.000000e+00> : vector<32x256xf32>
    %85 = tpu.matmul %84, %82, %cst_43 {dimension_numbers = #tpu.dot_dimension_numbers<[1], [0], [0], [1], [0, 0, 1, 1], [], []>} : vector<32x16xbf16>, vector<16x256xbf16>, vector<32x256xf32> -> vector<32x256xf32>
    %86 = arith.addf %81, %85 : vector<32x256xf32>
    %87 = vector.extract_strided_slice %4 {offsets = [0, 18], sizes = [16, 256], strides = [1, 1]} : vector<16x290xbf16> to vector<16x256xbf16>
    %c1_i32_44 = arith.constant 1 : i32
    %88 = vector.broadcast %c1_i32_44 : i32 to vector<1x256xi32>
    %89 = arith.addi %21, %88 : vector<1x256xi32>
    %c0_i32_45 = arith.constant 0 : i32
    %90 = vector.broadcast %c0_i32_45 : i32 to vector<1x256xi32>
    %91 = arith.cmpi sge, %89, %90 : vector<1x256xi32>
    %c1_i32_46 = arith.constant 1 : i32
    %92 = vector.broadcast %c1_i32_46 : i32 to vector<1x256xi32>
    %93 = arith.addi %21, %92 : vector<1x256xi32>
    %c16_i32_47 = arith.constant 16 : i32
    %94 = vector.broadcast %c16_i32_47 : i32 to vector<1x256xi32>
    %95 = arith.cmpi slt, %93, %94 : vector<1x256xi32>
    %96 = arith.andi %91, %95 : vector<1x256xi1>
    %cst_48 = arith.constant 0.000000e+00 : bf16
    %97 = vector.broadcast %cst_48 : bf16 to vector<16x256xbf16>
    %98 = vector.shape_cast %96 : vector<1x256xi1> to vector<1x256xi1>
    %99 = vector.broadcast %98 : vector<1x256xi1> to vector<16x256xi1>
    %100 = arith.select %99, %87, %97 : vector<16x256xi1>, vector<16x256xbf16>
    %c0_49 = arith.constant 0 : index
    %c5 = arith.constant 5 : index
    %c0_50 = arith.constant 0 : index
    %c0_51 = arith.constant 0 : index
    %101 = vector.load %arg4[%c0_49, %c5, %c0_50, %c0_51] : memref<1x9x32x16xbf16, #tpu.memory_space<vmem>>, vector<1x1x32x16xbf16>
    %102 = vector.shape_cast %101 : vector<1x1x32x16xbf16> to vector<32x16xbf16>
    %cst_52 = arith.constant dense<0.000000e+00> : vector<32x256xf32>
    %103 = tpu.matmul %102, %100, %cst_52 {dimension_numbers = #tpu.dot_dimension_numbers<[1], [0], [0], [1], [0, 0, 1, 1], [], []>} : vector<32x16xbf16>, vector<16x256xbf16>, vector<32x256xf32> -> vector<32x256xf32>
    %104 = arith.addf %86, %103 : vector<32x256xf32>
    %105 = vector.extract_strided_slice %4 {offsets = [0, 32], sizes = [16, 256], strides = [1, 1]} : vector<16x290xbf16> to vector<16x256xbf16>
    %c-1_i32_53 = arith.constant -1 : i32
    %106 = vector.broadcast %c-1_i32_53 : i32 to vector<1x256xi32>
    %107 = arith.addi %21, %106 : vector<1x256xi32>
    %c0_i32_54 = arith.constant 0 : i32
    %108 = vector.broadcast %c0_i32_54 : i32 to vector<1x256xi32>
    %109 = arith.cmpi sge, %107, %108 : vector<1x256xi32>
    %c-1_i32_55 = arith.constant -1 : i32
    %110 = vector.broadcast %c-1_i32_55 : i32 to vector<1x256xi32>
    %111 = arith.addi %21, %110 : vector<1x256xi32>
    %c16_i32_56 = arith.constant 16 : i32
    %112 = vector.broadcast %c16_i32_56 : i32 to vector<1x256xi32>
    %113 = arith.cmpi slt, %111, %112 : vector<1x256xi32>
    %114 = arith.andi %109, %113 : vector<1x256xi1>
    %cst_57 = arith.constant 0.000000e+00 : bf16
    %115 = vector.broadcast %cst_57 : bf16 to vector<16x256xbf16>
    %116 = vector.shape_cast %114 : vector<1x256xi1> to vector<1x256xi1>
    %117 = vector.broadcast %116 : vector<1x256xi1> to vector<16x256xi1>
    %118 = arith.select %117, %105, %115 : vector<16x256xi1>, vector<16x256xbf16>
    %c0_58 = arith.constant 0 : index
    %c6 = arith.constant 6 : index
    %c0_59 = arith.constant 0 : index
    %c0_60 = arith.constant 0 : index
    %119 = vector.load %arg4[%c0_58, %c6, %c0_59, %c0_60] : memref<1x9x32x16xbf16, #tpu.memory_space<vmem>>, vector<1x1x32x16xbf16>
    %120 = vector.shape_cast %119 : vector<1x1x32x16xbf16> to vector<32x16xbf16>
    %cst_61 = arith.constant dense<0.000000e+00> : vector<32x256xf32>
    %121 = tpu.matmul %120, %118, %cst_61 {dimension_numbers = #tpu.dot_dimension_numbers<[1], [0], [0], [1], [0, 0, 1, 1], [], []>} : vector<32x16xbf16>, vector<16x256xbf16>, vector<32x256xf32> -> vector<32x256xf32>
    %122 = arith.addf %104, %121 : vector<32x256xf32>
    %123 = vector.extract_strided_slice %4 {offsets = [0, 33], sizes = [16, 256], strides = [1, 1]} : vector<16x290xbf16> to vector<16x256xbf16>
    %c0_62 = arith.constant 0 : index
    %c7 = arith.constant 7 : index
    %c0_63 = arith.constant 0 : index
    %c0_64 = arith.constant 0 : index
    %124 = vector.load %arg4[%c0_62, %c7, %c0_63, %c0_64] : memref<1x9x32x16xbf16, #tpu.memory_space<vmem>>, vector<1x1x32x16xbf16>
    %125 = vector.shape_cast %124 : vector<1x1x32x16xbf16> to vector<32x16xbf16>
    %cst_65 = arith.constant dense<0.000000e+00> : vector<32x256xf32>
    %126 = tpu.matmul %125, %123, %cst_65 {dimension_numbers = #tpu.dot_dimension_numbers<[1], [0], [0], [1], [0, 0, 1, 1], [], []>} : vector<32x16xbf16>, vector<16x256xbf16>, vector<32x256xf32> -> vector<32x256xf32>
    %127 = arith.addf %122, %126 : vector<32x256xf32>
    %128 = vector.extract_strided_slice %4 {offsets = [0, 34], sizes = [16, 256], strides = [1, 1]} : vector<16x290xbf16> to vector<16x256xbf16>
    %c1_i32_66 = arith.constant 1 : i32
    %129 = vector.broadcast %c1_i32_66 : i32 to vector<1x256xi32>
    %130 = arith.addi %21, %129 : vector<1x256xi32>
    %c0_i32_67 = arith.constant 0 : i32
    %131 = vector.broadcast %c0_i32_67 : i32 to vector<1x256xi32>
    %132 = arith.cmpi sge, %130, %131 : vector<1x256xi32>
    %c1_i32_68 = arith.constant 1 : i32
    %133 = vector.broadcast %c1_i32_68 : i32 to vector<1x256xi32>
    %134 = arith.addi %21, %133 : vector<1x256xi32>
    %c16_i32_69 = arith.constant 16 : i32
    %135 = vector.broadcast %c16_i32_69 : i32 to vector<1x256xi32>
    %136 = arith.cmpi slt, %134, %135 : vector<1x256xi32>
    %137 = arith.andi %132, %136 : vector<1x256xi1>
    %cst_70 = arith.constant 0.000000e+00 : bf16
    %138 = vector.broadcast %cst_70 : bf16 to vector<16x256xbf16>
    %139 = vector.shape_cast %137 : vector<1x256xi1> to vector<1x256xi1>
    %140 = vector.broadcast %139 : vector<1x256xi1> to vector<16x256xi1>
    %141 = arith.select %140, %128, %138 : vector<16x256xi1>, vector<16x256xbf16>
    %c0_71 = arith.constant 0 : index
    %c8 = arith.constant 8 : index
    %c0_72 = arith.constant 0 : index
    %c0_73 = arith.constant 0 : index
    %142 = vector.load %arg4[%c0_71, %c8, %c0_72, %c0_73] : memref<1x9x32x16xbf16, #tpu.memory_space<vmem>>, vector<1x1x32x16xbf16>
    %143 = vector.shape_cast %142 : vector<1x1x32x16xbf16> to vector<32x16xbf16>
    %cst_74 = arith.constant dense<0.000000e+00> : vector<32x256xf32>
    %144 = tpu.matmul %143, %141, %cst_74 {dimension_numbers = #tpu.dot_dimension_numbers<[1], [0], [0], [1], [0, 0, 1, 1], [], []>} : vector<32x16xbf16>, vector<16x256xbf16>, vector<32x256xf32> -> vector<32x256xf32>
    %145 = arith.addf %127, %144 : vector<32x256xf32>
    %c0_75 = arith.constant 0 : index
    %c0_76 = arith.constant 0 : index
    %146 = vector.load %arg9[%c0_75, %c0_76] : memref<32x256xf32, #tpu.memory_space<vmem>>, vector<32x256xf32>
    tpu.vector_store %arg9[%c0_75, %c0_76], %145 {strides = array<i32>} : memref<32x256xf32, #tpu.memory_space<vmem>>, vector<32x256xf32>,
    %c2_i32 = arith.constant 2 : i32
    %147 = arith.cmpi eq, %arg2, %c2_i32 : i32
    %148 = arith.extui %147 : i1 to i32
    %c0_i32_77 = arith.constant 0 : i32
    %149 = arith.cmpi ne, %148, %c0_i32_77 : i32
    scf.if %149 {
      %c0_78 = arith.constant 0 : index
      %c0_79 = arith.constant 0 : index
      %150 = vector.load %arg9[%c0_78, %c0_79] : memref<32x256xf32, #tpu.memory_space<vmem>>, vector<32x256xf32>
      %c0_80 = arith.constant 0 : index
      %c0_81 = arith.constant 0 : index
      %151 = vector.load %arg5[%c0_80, %c0_81] : memref<32x1xf32, #tpu.memory_space<vmem>>, vector<32x1xf32>
      %152 = vector.broadcast %151 : vector<32x1xf32> to vector<32x256xf32>
      %153 = arith.addf %150, %152 : vector<32x256xf32>
      %154 = vector.extract_strided_slice %153 {offsets = [0, 0], sizes = [8, 256], strides = [1, 1]} : vector<32x256xf32> to vector<8x256xf32>
      %155 = arith.negf %154 : vector<8x256xf32>
      %156 = math.exp %155 : vector<8x256xf32>
      %cst_82 = arith.constant 1.000000e+00 : f32
      %157 = vector.broadcast %cst_82 : f32 to vector<8x256xf32>
      %158 = arith.addf %157, %156 : vector<8x256xf32>
      %159 = arith.divf %157, %158 : vector<8x256xf32>
      %160 = vector.extract_strided_slice %153 {offsets = [8, 0], sizes = [8, 256], strides = [1, 1]} : vector<32x256xf32> to vector<8x256xf32>
      %161 = arith.negf %160 : vector<8x256xf32>
      %162 = math.exp %161 : vector<8x256xf32>
      %cst_83 = arith.constant 1.000000e+00 : f32
      %163 = vector.broadcast %cst_83 : f32 to vector<8x256xf32>
      %164 = arith.addf %163, %162 : vector<8x256xf32>
      %165 = arith.divf %163, %164 : vector<8x256xf32>
      %166 = vector.extract_strided_slice %153 {offsets = [16, 0], sizes = [8, 256], strides = [1, 1]} : vector<32x256xf32> to vector<8x256xf32>
      %167 = arith.negf %166 : vector<8x256xf32>
      %168 = math.exp %167 : vector<8x256xf32>
      %cst_84 = arith.constant 1.000000e+00 : f32
      %169 = vector.broadcast %cst_84 : f32 to vector<8x256xf32>
      %170 = arith.addf %169, %168 : vector<8x256xf32>
      %171 = arith.divf %169, %170 : vector<8x256xf32>
      %172 = vector.extract_strided_slice %153 {offsets = [24, 0], sizes = [8, 256], strides = [1, 1]} : vector<32x256xf32> to vector<8x256xf32>
      %173 = math.tanh %172 : vector<8x256xf32>
      %c0_85 = arith.constant 0 : index
      %c0_86 = arith.constant 0 : index
      %c0_87 = arith.constant 0 : index
      %c0_88 = arith.constant 0 : index
      %174 = vector.load %arg6[%c0_85, %c0_86, %c0_87, %c0_88] : memref<1x1x8x256xf32, #tpu.memory_space<vmem>>, vector<1x1x8x256xf32>
      %175 = vector.shape_cast %174 : vector<1x1x8x256xf32> to vector<8x256xf32>
      %176 = arith.mulf %165, %175 : vector<8x256xf32>
      %177 = arith.mulf %159, %173 : vector<8x256xf32>
      %178 = arith.addf %176, %177 : vector<8x256xf32>
      %179 = math.tanh %178 : vector<8x256xf32>
      %180 = arith.mulf %171, %179 : vector<8x256xf32>
      %c0_89 = arith.constant 0 : index
      %c0_90 = arith.constant 0 : index
      %c0_91 = arith.constant 0 : index
      %c0_92 = arith.constant 0 : index
      %181 = vector.load %arg8[%c0_89, %c0_90, %c0_91, %c0_92] : memref<1x1x8x256xf32, #tpu.memory_space<vmem>>, vector<1x1x8x256xf32>
      %182 = vector.shape_cast %181 : vector<1x1x8x256xf32> to vector<8x256xf32>
      %183 = vector.shape_cast %178 : vector<8x256xf32> to vector<1x1x8x256xf32>
      tpu.vector_store %arg8[%c0_89, %c0_90, %c0_91, %c0_92], %183 {strides = array<i32>} : memref<1x1x8x256xf32, #tpu.memory_space<vmem>>, vector<1x1x8x256xf32>,
      %c0_93 = arith.constant 0 : index
      %c0_94 = arith.constant 0 : index
      %c0_95 = arith.constant 0 : index
      %c0_96 = arith.constant 0 : index
      %184 = vector.load %arg7[%c0_93, %c0_94, %c0_95, %c0_96] : memref<1x1x8x256xf32, #tpu.memory_space<vmem>>, vector<1x1x8x256xf32>
      %185 = vector.shape_cast %184 : vector<1x1x8x256xf32> to vector<8x256xf32>
      %186 = vector.shape_cast %180 : vector<8x256xf32> to vector<1x1x8x256xf32>
      tpu.vector_store %arg7[%c0_93, %c0_94, %c0_95, %c0_96], %186 {strides = array<i32>} : memref<1x1x8x256xf32, #tpu.memory_space<vmem>>, vector<1x1x8x256xf32>,
    } else {
    }
    return
  }
  func.func @transform_0(%arg0: i32, %arg1: i32, %arg2: i32) -> (i32, i32, i32, i32) {
    %0 = arith.addi %arg1, %arg2 : i32
    %c0_i32 = arith.constant 0 : i32
    %c0_i32_0 = arith.constant 0 : i32
    %c0_i32_1 = arith.constant 0 : i32
    return %arg0, %0, %c0_i32, %c0_i32_0 : i32, i32, i32, i32
  }
  func.func @transform_1(%arg0: i32, %arg1: i32, %arg2: i32) -> (i32, i32, i32, i32) {
    %c0_i32 = arith.constant 0 : i32
    %c0_i32_0 = arith.constant 0 : i32
    %c0_i32_1 = arith.constant 0 : i32
    %c0_i32_2 = arith.constant 0 : i32
    return %arg2, %c0_i32, %c0_i32_0, %c0_i32_1 : i32, i32, i32, i32
  }
  func.func @transform_2(%arg0: i32, %arg1: i32, %arg2: i32) -> (i32, i32) {
    %c0_i32 = arith.constant 0 : i32
    %c0_i32_0 = arith.constant 0 : i32
    %c0_i32_1 = arith.constant 0 : i32
    return %c0_i32, %c0_i32_0 : i32, i32
  }
  func.func @transform_3(%arg0: i32, %arg1: i32, %arg2: i32) -> (i32, i32, i32, i32) {
    %c0_i32 = arith.constant 0 : i32
    %c0_i32_0 = arith.constant 0 : i32
    %c0_i32_1 = arith.constant 0 : i32
    return %arg0, %arg1, %c0_i32, %c0_i32_0 : i32, i32, i32, i32
  }
  func.func @transform_4(%arg0: i32, %arg1: i32, %arg2: i32) -> (i32, i32, i32, i32) {
    %c0_i32 = arith.constant 0 : i32
    %c0_i32_0 = arith.constant 0 : i32
    %c0_i32_1 = arith.constant 0 : i32
    return %arg0, %arg1, %c0_i32, %c0_i32_0 : i32, i32, i32, i32
  }
  func.func @transform_5(%arg0: i32, %arg1: i32, %arg2: i32) -> (i32, i32, i32, i32) {
    %c0_i32 = arith.constant 0 : i32
    %c0_i32_0 = arith.constant 0 : i32
    %c0_i32_1 = arith.constant 0 : i32
    return %arg0, %arg1, %c0_i32, %c0_i32_0 : i32, i32, i32, i32
  }
}

</mosaic_0001>

<llo_original>
// kernel: conv_lstm_cell_3d.1
$region0: #{conv_lstm_cell_3d.1}
  #allocation0 [shape = 'u32[]', space=smem, size = 0x4, offset = 0x4, fixed_abs, tag = 'smem constant byte address 0x4 - core index']
  #allocation1 [shape = 'u32[144,128]{1,0:T(1,128)}', space=vmem, size = 0x12000, scoped, tag = 'internal scratch']
  #allocation2 [shape = 'f32[32,256]{1,0:T(8,128)}', space=vmem, size = 0x8000, scoped, tag = 'scratch operand']
  %s0 = inlined_call_operand.vmem [shape: bf16[2,6,16,290], index: 0, kind: input, shape index: {}]
  %s1 = inlined_call_operand.vmem [shape: bf16[3,9,32,16], index: 1, kind: input, shape index: {}]
  %s2 = inlined_call_operand.vmem [shape: f32[32,1], index: 2, kind: input, shape index: {}]
  %s3 = inlined_call_operand.vmem [shape: f32[2,4,8,256], index: 3, kind: input, shape index: {}]
  %s4 = inlined_call_operand.vmem [shape: f32[2,4,8,256], index: 4, kind: output, shape index: {0}]
  %s5 = inlined_call_operand.vmem [shape: f32[2,4,8,256], index: 5, kind: output, shape index: {1}]
  %6 = xla_tuple %s4, %s5
  %s7 = sld [smem:[#allocation0]]
  $region65: #{conv_lstm_cell_3d.1} parent=0
    _
  %s9 = ssub.s32 1, %s7
  %s10 = scalar_select 0, %s9, %s7
  loop: start=0, step=1, limit=26
  $region2: #{conv_lstm_cell_3d.1} parent=0 // loop_pre_header
    _
  $region3: #{conv_lstm_cell_3d.1} parent=0 // loop_header
    %s12 = sphi 0, %s16
    %p13 = scmp.ge.s32.totalorder %s12, 26
    %s19 = sphi 0, %s38
    %s20 = sphi 0, %s34
    %s21 = sphi 0, %s30
    %s22 = sphi 0, %s19
    %s23 = sphi 0, %s20
    %s24 = sphi 0, %s21
    %s25 = sphi 0, %s22
    %s26 = sphi 0, %s23
    %s27 = sphi 0, %s24
    %s45 = sphi 0, %s47
    %s48 = sphi 0, %s45
    %s49 = sphi 0, %s48
    %s65 = sphi 0, %s49
    %s71 = sphi 0, %s73
    %s74 = sphi 0, %s71
    %s75 = sphi 0, %s74
    %s91 = sphi 0, %s75
    %s95 = sphi 0, %s95
    %s97 = sphi 0, %s95
    %s98 = sphi 0, %s97
    %s112 = sphi 0, %s98
    %s120 = sphi 0, %s122
    %s123 = sphi 0, %s120
    %s124 = sphi 0, %s123
    %s140 = sphi 0, %s124
    %s148 = sphi 0, %s150
    %s151 = sphi 0, %s148
    %s152 = sphi 0, %s151
    %s168 = sphi 0, %s152
    %s176 = sphi 0, %s178
    %s179 = sphi 0, %s176
    %s180 = sphi 0, %s179
    %s196 = sphi 0, %s180
  $region4: #{conv_lstm_cell_3d.1} parent=0 // loop_header_branch
    %15 = sbr.rel (%p13) target = $region8
  $region5: #{conv_lstm_cell_3d.1} parent=0 // loop_body
    %s17 = ssub.s32 %s12, 1
    %s18 = ssub.s32 %s12, 2
    %s28 = sadd.s32 1, %s21
    %p29 = scmp.ge.s32.totalorder %s28, 3
    %s30 = scalar_select %p29, 0, %s28
    %s31 = sadd.s32 1, %s20
    %s32 = scalar_select %p29, %s31, %s20
    %p33 = scmp.ge.s32.totalorder %s32, 4
    %s34 = scalar_select %p33, 0, %s32
    %s35 = sadd.s32 1, %s19
    %s36 = scalar_select %p33, %s35, %s19
    %p37 = scmp.ge.s32.totalorder %s36, 2
    %s38 = scalar_select %p37, 0, %s36
    %s39 = sadd.s32 %s20, %s21
    %s40 = sadd.s32 %s34, %s30
    %s41 = ssub.s32 %s19, %s38
    %s42 = ssub.s32 %s39, %s40
    %s43 = sor.u32 %s41, %s42
    %p44 = scmp.eq.s32.totalorder %s43, 0
    %s46 = sadd.s32 %s45, 1
    %s47 = scalar_select %p44, %s45, %s46
    %p50 = pneg %p44
    %p51 = scmp.eq.s32.totalorder %s12, 23
    %p52 = por %p50, %p51
    %p53 = scmp.ne.s32.totalorder %s45, %s48
    %p54 = scmp.eq.s32.totalorder %s12, 0
    %p55 = por %p53, %p54
    %p56 = scmp.ne.s32.totalorder %s45, %s48
    %p57 = scmp.eq.s32.totalorder %s17, 23
    %p58 = por %p56, %p57
    %p59 = scmp.ne.s32.totalorder %s48, %s49
    %p60 = scmp.eq.s32.totalorder %s17, 0
    %p61 = por %p59, %p60
    %p62 = scmp.ne.s32.totalorder %s48, %s49
    %p63 = scmp.eq.s32.totalorder %s18, 23
    %p64 = por %p62, %p63
    %p66 = scmp.ne.s32.totalorder %s49, %s65
    %p67 = scmp.eq.s32.totalorder %s18, 0
    %p68 = por %p66, %p67
    %s69 = ssub.s32 %s21, %s30
    %p70 = scmp.eq.s32.totalorder %s69, 0
    %s72 = sadd.s32 %s71, 1
    %s73 = scalar_select %p70, %s71, %s72
    %p76 = pneg %p70
    %p77 = scmp.eq.s32.totalorder %s12, 23
    %p78 = por %p76, %p77
    %p79 = scmp.ne.s32.totalorder %s71, %s74
    %p80 = scmp.eq.s32.totalorder %s12, 0
    %p81 = por %p79, %p80
    %p82 = scmp.ne.s32.totalorder %s71, %s74
    %p83 = scmp.eq.s32.totalorder %s17, 23
    %p84 = por %p82, %p83
    %p85 = scmp.ne.s32.totalorder %s74, %s75
    %p86 = scmp.eq.s32.totalorder %s17, 0
    %p87 = por %p85, %p86
    %p88 = scmp.ne.s32.totalorder %s74, %s75
    %p89 = scmp.eq.s32.totalorder %s18, 23
    %p90 = por %p88, %p89
    %p92 = scmp.ne.s32.totalorder %s75, %s91
    %p93 = scmp.eq.s32.totalorder %s18, 0
    %p94 = por %p92, %p93
    %s96 = sadd.s32 %s95, 1
    %p99 = scmp.eq.s32.totalorder %s12, 23
    %p100 = scmp.ne.s32.totalorder %s95, %s97
    %p101 = scmp.eq.s32.totalorder %s12, 0
    %p102 = por %p100, %p101
    %p103 = scmp.ne.s32.totalorder %s95, %s97
    %p104 = scmp.eq.s32.totalorder %s17, 23
    %p105 = por %p103, %p104
    %p106 = scmp.ne.s32.totalorder %s97, %s98
    %p107 = scmp.eq.s32.totalorder %s17, 0
    %p108 = por %p106, %p107
    %p109 = scmp.ne.s32.totalorder %s97, %s98
    %p110 = scmp.eq.s32.totalorder %s18, 23
    %p111 = por %p109, %p110
    %p113 = scmp.ne.s32.totalorder %s98, %s112
    %p114 = scmp.eq.s32.totalorder %s18, 0
    %p115 = por %p113, %p114
    %s116 = ssub.s32 %s19, %s38
    %s117 = ssub.s32 %s20, %s34
    %s118 = sor.u32 %s116, %s117
    %p119 = scmp.eq.s32.totalorder %s118, 0
    %s121 = sadd.s32 %s120, 1
    %s122 = scalar_select %p119, %s120, %s121
    %p125 = pneg %p119
    %p126 = scmp.eq.s32.totalorder %s12, 23
    %p127 = por %p125, %p126
    %p128 = scmp.ne.s32.totalorder %s120, %s123
    %p129 = scmp.eq.s32.totalorder %s12, 0
    %p130 = por %p128, %p129
    %p131 = scmp.ne.s32.totalorder %s120, %s123
    %p132 = scmp.eq.s32.totalorder %s17, 23
    %p133 = por %p131, %p132
    %p134 = scmp.ne.s32.totalorder %s123, %s124
    %p135 = scmp.eq.s32.totalorder %s17, 0
    %p136 = por %p134, %p135
    %p137 = scmp.ne.s32.totalorder %s123, %s124
    %p138 = scmp.eq.s32.totalorder %s18, 23
    %p139 = por %p137, %p138
    %p141 = scmp.ne.s32.totalorder %s124, %s140
    %p142 = scmp.eq.s32.totalorder %s18, 0
    %p143 = por %p141, %p142
    %s144 = ssub.s32 %s19, %s38
    %s145 = ssub.s32 %s20, %s34
    %s146 = sor.u32 %s144, %s145
    %p147 = scmp.eq.s32.totalorder %s146, 0
    %s149 = sadd.s32 %s148, 1
    %s150 = scalar_select %p147, %s148, %s149
    %p153 = pneg %p147
    %p154 = scmp.eq.s32.totalorder %s12, 23
    %p155 = por %p153, %p154
    %p156 = scmp.ne.s32.totalorder %s148, %s151
    %p157 = scmp.eq.s32.totalorder %s12, 0
    %p158 = por %p156, %p157
    %p159 = scmp.ne.s32.totalorder %s148, %s151
    %p160 = scmp.eq.s32.totalorder %s17, 23
    %p161 = por %p159, %p160
    %p162 = scmp.ne.s32.totalorder %s151, %s152
    %p163 = scmp.eq.s32.totalorder %s17, 0
    %p164 = por %p162, %p163
    %p165 = scmp.ne.s32.totalorder %s151, %s152
    %p166 = scmp.eq.s32.totalorder %s18, 23
    %p167 = por %p165, %p166
    %p169 = scmp.ne.s32.totalorder %s152, %s168
    %p170 = scmp.eq.s32.totalorder %s18, 0
    %p171 = por %p169, %p170
    %s172 = ssub.s32 %s19, %s38
    %s173 = ssub.s32 %s20, %s34
    %s174 = sor.u32 %s172, %s173
    %p175 = scmp.eq.s32.totalorder %s174, 0
    %s177 = sadd.s32 %s176, 1
    %s178 = scalar_select %p175, %s176, %s177
    %p181 = pneg %p175
    %p182 = scmp.eq.s32.totalorder %s12, 23
    %p183 = por %p181, %p182
    %p184 = scmp.ne.s32.totalorder %s176, %s179
    %p185 = scmp.eq.s32.totalorder %s12, 0
    %p186 = por %p184, %p185
    %p187 = scmp.ne.s32.totalorder %s176, %s179
    %p188 = scmp.eq.s32.totalorder %s17, 23
    %p189 = por %p187, %p188
    %p190 = scmp.ne.s32.totalorder %s179, %s180
    %p191 = scmp.eq.s32.totalorder %s17, 0
    %p192 = por %p190, %p191
    %p193 = scmp.ne.s32.totalorder %s179, %s180
    %p194 = scmp.eq.s32.totalorder %s18, 23
    %p195 = por %p193, %p194
    %p197 = scmp.ne.s32.totalorder %s180, %s196
    %p198 = scmp.eq.s32.totalorder %s18, 0
    %p199 = por %p197, %p198
    %p200 = scmp.le.s32.totalorder 1, %s12
    %p201 = scmp.lt.s32.totalorder %s12, 25
    %p202 = pnand %p200, %p201
    %p203 = pneg %p202
    // Predicated region
    $region9: #{conv_lstm_cell_3d.1} parent=5 // pred_check
      _
    $region10: #{conv_lstm_cell_3d.1} parent=5 // pred_check_branch
      %205 = sbr.rel (%p202) target = $region12
    $region11: #{conv_lstm_cell_3d.1} parent=5 // pred_region
      %s206 = ssub.s32 %s12, 1
      // Predicated region
      $region13: #{conv_lstm_cell_3d.1} parent=11 // pred_check
        %p207 = pneg %p108
      $region14: #{conv_lstm_cell_3d.1} parent=11 // pred_check_branch
        %209 = sbr.rel (%p207) target = $region16
      $region15: #{conv_lstm_cell_3d.1} parent=11 // pred_region
        _
      $region16: #{conv_lstm_cell_3d.1} parent=11 // pred_fallthru
        _
    $region12: #{conv_lstm_cell_3d.1} parent=5 // pred_fallthru
      _
    %p210 = scmp.lt.s32.totalorder %s12, 24
    // Predicated region
    $region17: #{conv_lstm_cell_3d.1} parent=5 // pred_check
      %p211 = pneg %p210
    $region18: #{conv_lstm_cell_3d.1} parent=5 // pred_check_branch
      %213 = sbr.rel (%p211) target = $region20
    $region19: #{conv_lstm_cell_3d.1} parent=5 // pred_region
      // Predicated region
      $region21: #{conv_lstm_cell_3d.1} parent=19 // pred_check
        %p214 = pneg %p55
      $region22: #{conv_lstm_cell_3d.1} parent=19 // pred_check_branch
        %216 = sbr.rel (%p214) target = $region24
      $region23: #{conv_lstm_cell_3d.1} parent=19 // pred_region
        %s217 = sadd.s32 %s20, %s21
        %p218 = scmp.lt.s32.totalorder %s19, 1
        %s219 = scalar_select %p218, %s19, 1
        %p220 = scmp.lt.s32.totalorder %s217, 5
        %s221 = scalar_select %p220, %s217, 5
        %s222 = smul.addr %s221, 6
        %s223 = smul.addr %s219, 36
        %s224 = sadd.s32 %s222, %s223
        %s225 = smul.addr %s224, 4
        %s226 = scalar_lea.vmem %s0, %s225
        %s227 = sadd.s32 %s20, %s21
      $region24: #{conv_lstm_cell_3d.1} parent=19 // pred_fallthru
        _
      // Predicated region
      $region25: #{conv_lstm_cell_3d.1} parent=19 // pred_check
        %p228 = pneg %p81
      $region26: #{conv_lstm_cell_3d.1} parent=19 // pred_check_branch
        %230 = sbr.rel (%p228) target = $region28
      $region27: #{conv_lstm_cell_3d.1} parent=19 // pred_region
        %p231 = scmp.lt.s32.totalorder %s21, 2
        %s232 = scalar_select %p231, %s21, 2
        %s233 = smul.addr %s232, 36
        %s234 = smul.addr %s233, 4
        %s235 = scalar_lea.vmem %s1, %s234
      $region28: #{conv_lstm_cell_3d.1} parent=19 // pred_fallthru
        _
      // Predicated region
      $region29: #{conv_lstm_cell_3d.1} parent=19 // pred_check
        %p236 = pneg %p130
      $region30: #{conv_lstm_cell_3d.1} parent=19 // pred_check_branch
        %238 = sbr.rel (%p236) target = $region32
      $region31: #{conv_lstm_cell_3d.1} parent=19 // pred_region
        %p239 = scmp.lt.s32.totalorder %s19, 1
        %s240 = scalar_select %p239, %s19, 1
        %p241 = scmp.lt.s32.totalorder %s20, 3
        %s242 = scalar_select %p241, %s20, 3
        %s243 = smul.addr %s242, 2
        %s244 = smul.addr %s240, 8
        %s245 = sadd.s32 %s243, %s244
        %s246 = smul.addr %s245, 8
        %s247 = scalar_lea.vmem %s3, %s246
      $region32: #{conv_lstm_cell_3d.1} parent=19 // pred_fallthru
        _
    $region20: #{conv_lstm_cell_3d.1} parent=5 // pred_fallthru
      _
    %p248 = scmp.le.s32.totalorder 1, %s12
    %p249 = scmp.lt.s32.totalorder %s12, 25
    %p250 = pnand %p248, %p249
    %p251 = pneg %p250
    // Predicated region
    $region33: #{conv_lstm_cell_3d.1} parent=5 // pred_check
      _
    $region34: #{conv_lstm_cell_3d.1} parent=5 // pred_check_branch
      %253 = sbr.rel (%p250) target = $region36
    $region35: #{conv_lstm_cell_3d.1} parent=5 // pred_region
      %s254 = ssub.s32 %s12, 1
      %s255 = sadd.s32 %s23, %s24
      %p256 = scmp.lt.s32.totalorder %s22, 1
      %s257 = scalar_select %p256, %s22, 1
      %p258 = scmp.lt.s32.totalorder %s255, 5
      %s259 = scalar_select %p258, %s255, 5
      %s260 = smul.addr %s259, 6
      %s261 = smul.addr %s257, 36
      %s262 = sadd.s32 %s260, %s261
      %s263 = smul.addr %s262, 4
      %s264 = scalar_lea.vmem %s0, %s263
      %p265 = pneg %p61
      %p266 = pneg %p58
      %p267 = scmp.lt.s32.totalorder %s24, 2
      %s268 = scalar_select %p267, %s24, 2
      %s269 = smul.addr %s268, 36
      %s270 = smul.addr %s269, 4
      %s271 = scalar_lea.vmem %s1, %s270
      %p272 = pneg %p87
      %p273 = pneg %p84
      %p274 = pneg %p108
      %p275 = pneg %p105
      %p276 = scmp.lt.s32.totalorder %s22, 1
      %s277 = scalar_select %p276, %s22, 1
      %p278 = scmp.lt.s32.totalorder %s23, 3
      %s279 = scalar_select %p278, %s23, 3
      %s280 = smul.addr %s279, 2
      %s281 = smul.addr %s277, 8
      %s282 = sadd.s32 %s280, %s281
      %s283 = smul.addr %s282, 8
      %s284 = scalar_lea.vmem %s3, %s283
      %p285 = pneg %p136
      %p286 = pneg %p133
      %p287 = pneg %p164
      %p288 = pneg %p161
      %p289 = scmp.lt.s32.totalorder %s22, 1
      %s290 = scalar_select %p289, %s22, 1
      %p291 = scmp.lt.s32.totalorder %s23, 3
      %s292 = scalar_select %p291, %s23, 3
      %s293 = smul.addr %s292, 2
      %s294 = smul.addr %s290, 8
      %s295 = sadd.s32 %s293, %s294
      %s296 = smul.addr %s295, 8
      %s297 = scalar_lea.vmem %s4, %s296
      %p298 = pneg %p192
      %p299 = pneg %p189
      %p300 = scmp.lt.s32.totalorder %s22, 1
      %s301 = scalar_select %p300, %s22, 1
      %p302 = scmp.lt.s32.totalorder %s23, 3
      %s303 = scalar_select %p302, %s23, 3
      %s304 = smul.addr %s303, 2
      %s305 = smul.addr %s301, 8
      %s306 = sadd.s32 %s304, %s305
      %s307 = smul.addr %s306, 8
      %s308 = scalar_lea.vmem %s5, %s307
      %s309 = sadd.s32 %s23, %s24
      %p310 = scmp.lt.s32.totalorder %s22, 1
      %s311 = scalar_select %p310, %s22, 1
      %p312 = scmp.lt.s32.totalorder %s309, 5
      %s313 = scalar_select %p312, %s309, 5
      %s314 = smul.addr %s313, 6
      %s315 = smul.addr %s311, 36
      %s316 = sadd.s32 %s314, %s315
      %s317 = smul.addr %s316, 4
      %s318 = scalar_lea.vmem %s0, %s317
      %s319 = sadd.s32 %s23, %s24
      %p320 = scmp.lt.s32.totalorder %s24, 2
      %s321 = scalar_select %p320, %s24, 2
      %s322 = smul.addr %s321, 36
      %s323 = smul.addr %s322, 4
      %s324 = scalar_lea.vmem %s1, %s323
      %p325 = scmp.lt.s32.totalorder %s22, 1
      %s326 = scalar_select %p325, %s22, 1
      %p327 = scmp.lt.s32.totalorder %s23, 3
      %s328 = scalar_select %p327, %s23, 3
      %s329 = smul.addr %s328, 2
      %s330 = smul.addr %s326, 8
      %s331 = sadd.s32 %s329, %s330
      %s332 = smul.addr %s331, 8
      %s333 = scalar_lea.vmem %s3, %s332
      %p334 = scmp.lt.s32.totalorder %s22, 1
      %s335 = scalar_select %p334, %s22, 1
      %p336 = scmp.lt.s32.totalorder %s23, 3
      %s337 = scalar_select %p336, %s23, 3
      %s338 = smul.addr %s337, 2
      %s339 = smul.addr %s335, 8
      %s340 = sadd.s32 %s338, %s339
      %s341 = smul.addr %s340, 8
      %s342 = scalar_lea.vmem %s4, %s341
      %p343 = scmp.lt.s32.totalorder %s22, 1
      %s344 = scalar_select %p343, %s22, 1
      %p345 = scmp.lt.s32.totalorder %s23, 3
      %s346 = scalar_select %p345, %s23, 3
      %s347 = smul.addr %s346, 2
      %s348 = smul.addr %s344, 8
      %s349 = sadd.s32 %s347, %s348
      %s350 = smul.addr %s349, 8
      %s351 = scalar_lea.vmem %s5, %s350
      %p355 = scmp.eq.s32.totalorder %s24, 0
      // Predicated region
      $region37: #{conv_lstm_cell_3d.1} parent=35 // pred_check
        %p356 = pneg %p355
      $region38: #{conv_lstm_cell_3d.1} parent=35 // pred_check_branch
        %358 = sbr.rel (%p356) target = $region40
      $region39: #{conv_lstm_cell_3d.1} parent=35 // pred_region
        %359 = vst [vmem:[#allocation2] sm:$0xff] 0.0
        %360 = vst [vmem:[#allocation2 + $0x8] sm:$0xff] 0.0
        %361 = vst [vmem:[#allocation2 + $0x10] sm:$0xff] 0.0
        %362 = vst [vmem:[#allocation2 + $0x18] sm:$0xff] 0.0
        %363 = vst [vmem:[#allocation2 + $0x20] sm:$0xff] 0.0
        %364 = vst [vmem:[#allocation2 + $0x28] sm:$0xff] 0.0
        %365 = vst [vmem:[#allocation2 + $0x30] sm:$0xff] 0.0
        %366 = vst [vmem:[#allocation2 + $0x38] sm:$0xff] 0.0
      $region40: #{conv_lstm_cell_3d.1} parent=35 // pred_fallthru
        _
      %v367 = vld [vmem:[%s318] sm:$0xff]
      %v368 = vld [vmem:[%s318 + $0x8] sm:$0xf]
      %v369 = vld [vmem:[%s318 + $0xc] sm:$0xff]
      %v370 = vld [vmem:[%s318 + $0x14] sm:$0xf]
      %v371 = vlaneseq
      %v372 = vand.u32 %v371, 127
      %v373 = vadd.s32 %v372, 128
      %vm374 = vcmp.lt.s32.totalorder %v372, 0
      %v375 = vsub.s32 0, %v372
      %v376 = vsel %vm374, %v375, %v372
      %v377 = vshrl.u32 %v376, 4
      %v378 = vand.u32 %v376, 15
      %v379 = vsub.s32 0, %v378
      %v380 = vsel %vm374, %v379, %v378
      %vm381 = vcmp.lt.s32.totalorder %v373, 0
      %v382 = vsub.s32 0, %v373
      %v383 = vsel %vm381, %v382, %v373
      %v384 = vshrl.u32 %v383, 4
      %v385 = vand.u32 %v383, 15
      %v386 = vsub.s32 0, %v385
      %v387 = vsel %vm381, %v386, %v385
      %vm388 = vcmp.ne.s32.totalorder %v380, 0
      %vm389 = vcmp.ne.s32.totalorder %v387, 0
      %vm390 = vcmp.lt.s32.totalorder %v380, 0
      %vm391 = vcmp.lt.s32.totalorder %v387, 0
      %vm392 = vmand %vm390, %vm388
      %vm393 = vmand %vm391, %vm389
      %v394 = vadd.s32 %v380, 16
      %v395 = vadd.s32 %v387, 16
      %v396 = vsel %vm392, %v394, %v380
      %v397 = vsel %vm393, %v395, %v387
      %v398 = vld [vmem:[#allocation2] sm:$0xff]
      %v399 = vld [vmem:[#allocation2 + $0x8] sm:$0xff]
      %v400 = vld [vmem:[#allocation2 + $0x10] sm:$0xff]
      %v401 = vld [vmem:[#allocation2 + $0x18] sm:$0xff]
      %v402 = vld [vmem:[#allocation2 + $0x20] sm:$0xff]
      %v403 = vld [vmem:[#allocation2 + $0x28] sm:$0xff]
      %v404 = vld [vmem:[#allocation2 + $0x30] sm:$0xff]
      %v405 = vld [vmem:[#allocation2 + $0x38] sm:$0xff]
      %v406 = vadd.s32 %v396, 4294967295
      %v407 = vadd.s32 %v397, 4294967295
      %vm408 = vcmp.ge.s32.totalorder %v406, 0
      %vm409 = vcmp.ge.s32.totalorder %v407, 0
      %vm410 = vcmp.lt.s32.totalorder %v406, 16
      %vm411 = vcmp.lt.s32.totalorder %v407, 16
      %vm412 = vmand %vm408, %vm410
      %vm413 = vmand %vm409, %vm411
      %v414 = vsel %vm412, 1, 0
      %v415 = vsel %vm413, 1, 0
      %vm416 = vcmp.eq.s32.totalorder %v414, 1
      %vm417 = vcmp.eq.s32.totalorder %v415, 1
      %vm418 = vmpackc.low %vm417, %vm416
      %v419 = vsel %vm418, %v367, 0
      %v420 = vsel %vm418, %v369, 0
      %v421 = vld [vmem:[%s324] sm:$0xf]
      %v422 = vld [vmem:[%s324 + $0x4] sm:$0xf]
      %v423 = vld [vmem:[%s324 + $0x8] sm:$0xf]
      %v424 = vld [vmem:[%s324 + $0xc] sm:$0xf]
      %v429 = vunpack.c.l.b16 %v421
      %v430 = vunpack.c.l.b16 %v422
      %v431 = vunpack.c.l.b16 %v423
      %v432 = vunpack.c.l.b16 %v424
      %v433 = vpack.c.b16 %v430, %v429
      %v434 = vpack.c.b16 %v432, %v431
      %v437 = vunpack.c.l.b16 %v419
      %v438 = vunpack.c.h.b16 %v419
      %v439 = vunpack.c.l.b16 %v420
      %v440 = vunpack.c.h.b16 %v420
      %v441 = vpack.c.b16 %v439, %v437
      %v442 = vpack.c.b16 %v440, %v438
      %vm445 = vcmask 130048
      %v447 = vsel %vm445, %v433, 0
      %v450 = vsel %vm445, %v434, 0
      %452 = vmatprep.subr.bf16.mxu0 0
      %453 = vmatpush1.bf16.msra.mxu0 0
      %454 = vmatprep.subr.bf16.mxu0 0
      %455 = vmatpush1.bf16.msra.mxu0 0
      %456 = vmatprep.subr.bf16.mxu0 0
      %457 = vmatpush1.bf16.msra.mxu0 0
      %458 = vmatprep.subr.bf16.mxu0 0
      %459 = vmatpush1.bf16.msra.mxu0 0
      %460 = vmatprep.subr.bf16.mxu0 0
      %461 = vmatpush1.bf16.msra.mxu0 0
      %462 = vmatprep.subr.bf16.mxu0 0
      %463 = vmatpush1.bf16.msra.mxu0 0
      %464 = vmatprep.subr.bf16.mxu0 0
      %465 = vmatpush1.bf16.msra.mxu0 0
      %466 = vmatprep.subr.bf16.mxu0 %v442
      %467 = vmatpush1.bf16.msra.mxu0 %v441
      %468 = vmatprep.subr.bf16.mxu0 0
      %469 = vmatpush2.bf16.msra.mxu0 0
      %470 = vmatprep.subr.bf16.mxu0 0
      %471 = vmatpush2.bf16.msra.mxu0 0
      %472 = vmatprep.subr.bf16.mxu0 0
      %473 = vmatpush2.bf16.msra.mxu0 0
      %474 = vmatprep.subr.bf16.mxu0 0
      %475 = vmatpush2.bf16.msra.mxu0 0
      %476 = vmatprep.subr.bf16.mxu0 0
      %477 = vmatpush2.bf16.msra.mxu0 0
      %478 = vmatprep.subr.bf16.mxu0 0
      %479 = vmatpush2.bf16.msra.mxu0 0
      %480 = vmatprep.subr.bf16.mxu0 0
      %481 = vmatpush2.bf16.msra.mxu0 0
      %482 = vmatprep.subr.bf16.mxu0 0
      %483 = vmatpush2.bf16.msra.mxu0 0
      %484 = vmatprep.mubr.bf16.mxu0 0
      %485 = vmatmul.mubr.bf16.gmra.mxu0 %v447
      %v486 = vpop.f32.mrf.mxu0
      %v487 = vadd.f32 0.0, %v486
      %v488 = vpop.f32.mrf.mxu0
      %v489 = vadd.f32 0.0, %v488
      %v490 = vpop.f32.mrf.mxu0
      %v491 = vadd.f32 0.0, %v490
      %v492 = vpop.f32.mrf.mxu0
      %v493 = vadd.f32 0.0, %v492
      %494 = vmatprep.mubr.bf16.mxu0 0
      %495 = vmatmul.mubr.bf16.gmra.mxu0 %v450
      %v496 = vpop.f32.mrf.mxu0
      %v497 = vadd.f32 0.0, %v496
      %v498 = vpop.f32.mrf.mxu0
      %v499 = vadd.f32 0.0, %v498
      %v500 = vpop.f32.mrf.mxu0
      %v501 = vadd.f32 0.0, %v500
      %v502 = vpop.f32.mrf.mxu0
      %v503 = vadd.f32 0.0, %v502
      %504 = vdwg.mxu0
      %v505 = vadd.f32 %v398, %v487
      %v506 = vadd.f32 %v399, %v489
      %v507 = vadd.f32 %v400, %v491
      %v508 = vadd.f32 %v401, %v493
      %v509 = vadd.f32 %v402, %v497
      %v510 = vadd.f32 %v403, %v499
      %v511 = vadd.f32 %v404, %v501
      %v512 = vadd.f32 %v405, %v503
      %s513 = scalar_lea.vmem %s324, 16
      %v514 = vld [vmem:[%s513] sm:$0xf]
      %v515 = vld [vmem:[%s513 + $0x4] sm:$0xf]
      %v516 = vld [vmem:[%s513 + $0x8] sm:$0xf]
      %v517 = vld [vmem:[%s513 + $0xc] sm:$0xf]
      %v522 = vunpack.c.l.b16 %v514
      %v523 = vunpack.c.l.b16 %v515
      %v524 = vunpack.c.l.b16 %v516
      %v525 = vunpack.c.l.b16 %v517
      %v526 = vpack.c.b16 %v523, %v522
      %v527 = vpack.c.b16 %v525, %v524
      %v532 = vunpack.c.l.b16 %v367
      %v533 = vunpack.c.h.b16 %v367
      %v534 = vunpack.c.l.b16 %v368
      %v535 = vunpack.c.l.b16 %v369
      %v536 = vunpack.c.h.b16 %v369
      %v537 = vunpack.c.l.b16 %v370
      %v538 = vpack.c.b16 %v535, %v532
      %v539 = vpack.c.b16 %v536, %v533
      %v540 = vpack.c.b16 %v537, %v534
      %541 = vrot.lane.b32.xlu0 %v538, 127
      %v542 = vpop.permute.xlu0 %541
      %543 = vrot.lane.b32.xlu0 %v539, 127
      %v544 = vpop.permute.xlu0 %543
      %545 = vrot.lane.b32.xlu0 %v540, 127
      %v546 = vpop.permute.xlu0 %545
      %vm547 = vcmask 1039360
      %v548 = vsel %vm547, %v542, %v544
      %v549 = vsel %vm547, %v544, %v546
      %v553 = vsel %vm445, %v526, 0
      %v556 = vsel %vm445, %v527, 0
      %558 = vmatprep.subr.bf16.mxu0 0
      %559 = vmatpush1.bf16.msra.mxu0 0
      %560 = vmatprep.subr.bf16.mxu0 0
      %561 = vmatpush1.bf16.msra.mxu0 0
      %562 = vmatprep.subr.bf16.mxu0 0
      %563 = vmatpush1.bf16.msra.mxu0 0
      %564 = vmatprep.subr.bf16.mxu0 0
      %565 = vmatpush1.bf16.msra.mxu0 0
      %566 = vmatprep.subr.bf16.mxu0 0
      %567 = vmatpush1.bf16.msra.mxu0 0
      %568 = vmatprep.subr.bf16.mxu0 0
      %569 = vmatpush1.bf16.msra.mxu0 0
      %570 = vmatprep.subr.bf16.mxu0 0
      %571 = vmatpush1.bf16.msra.mxu0 0
      %572 = vmatprep.subr.bf16.mxu0 %v549
      %573 = vmatpush1.bf16.msra.mxu0 %v548
      %574 = vmatprep.subr.bf16.mxu0 0
      %575 = vmatpush2.bf16.msra.mxu0 0
      %576 = vmatprep.subr.bf16.mxu0 0
      %577 = vmatpush2.bf16.msra.mxu0 0
      %578 = vmatprep.subr.bf16.mxu0 0
      %579 = vmatpush2.bf16.msra.mxu0 0
      %580 = vmatprep.subr.bf16.mxu0 0
      %581 = vmatpush2.bf16.msra.mxu0 0
      %582 = vmatprep.subr.bf16.mxu0 0
      %583 = vmatpush2.bf16.msra.mxu0 0
      %584 = vmatprep.subr.bf16.mxu0 0
      %585 = vmatpush2.bf16.msra.mxu0 0
      %586 = vmatprep.subr.bf16.mxu0 0
      %587 = vmatpush2.bf16.msra.mxu0 0
      %588 = vmatprep.subr.bf16.mxu0 0
      %589 = vmatpush2.bf16.msra.mxu0 0
      %590 = vmatprep.mubr.bf16.mxu0 0
      %591 = vmatmul.mubr.bf16.gmra.mxu0 %v553
      %v592 = vpop.f32.mrf.mxu0
      %v593 = vadd.f32 0.0, %v592
      %v594 = vpop.f32.mrf.mxu0
      %v595 = vadd.f32 0.0, %v594
      %v596 = vpop.f32.mrf.mxu0
      %v597 = vadd.f32 0.0, %v596
      %v598 = vpop.f32.mrf.mxu0
      %v599 = vadd.f32 0.0, %v598
      %600 = vmatprep.mubr.bf16.mxu0 0
      %601 = vmatmul.mubr.bf16.gmra.mxu0 %v556
      %v602 = vpop.f32.mrf.mxu0
      %v603 = vadd.f32 0.0, %v602
      %v604 = vpop.f32.mrf.mxu0
      %v605 = vadd.f32 0.0, %v604
      %v606 = vpop.f32.mrf.mxu0
      %v607 = vadd.f32 0.0, %v606
      %v608 = vpop.f32.mrf.mxu0
      %v609 = vadd.f32 0.0, %v608
      %610 = vdwg.mxu0
      %v611 = vadd.f32 %v505, %v593
      %v612 = vadd.f32 %v506, %v595
      %v613 = vadd.f32 %v507, %v597
      %v614 = vadd.f32 %v508, %v599
      %v615 = vadd.f32 %v509, %v603
      %v616 = vadd.f32 %v510, %v605
      %v617 = vadd.f32 %v511, %v607
      %v618 = vadd.f32 %v512, %v609
      %v619 = vadd.s32 %v396, 1
      %v620 = vadd.s32 %v397, 1
      %vm621 = vcmp.ge.s32.totalorder %v619, 0
      %vm622 = vcmp.ge.s32.totalorder %v620, 0
      %vm623 = vcmp.lt.s32.totalorder %v619, 16
      %vm624 = vcmp.lt.s32.totalorder %v620, 16
      %vm625 = vmand %vm621, %vm623
      %vm626 = vmand %vm622, %vm624
      %v627 = vsel %vm625, 1, 0
      %v628 = vsel %vm626, 1, 0
      %vm629 = vcmp.eq.s32.totalorder %v627, 1
      %vm630 = vcmp.eq.s32.totalorder %v628, 1
      %vm631 = vmpackc.low %vm630, %vm629
      %v632 = vsel %vm631, 65537, 0
      %633 = vrot.lane.b32.xlu0 %v632, 2
      %v634 = vpop.permute.xlu0 %633
      %v635 = vrot.slane %v634, 4
      %vm636 = vcmask 15360
      %v637 = vsel %vm636, %v635, %v634
      %vm638 = vcmp.ne.s16.totalorder %v637, 0
      %vm639 = vcmp.ne.s16.totalorder %v635, 0
      %v640 = vsel %vm638, %v367, 0
      %v641 = vsel %vm639, %v368, 0
      %v642 = vsel %vm638, %v369, 0
      %v643 = vsel %vm639, %v370, 0
      %s644 = scalar_lea.vmem %s324, 32
      %v645 = vld [vmem:[%s644] sm:$0xf]
      %v646 = vld [vmem:[%s644 + $0x4] sm:$0xf]
      %v647 = vld [vmem:[%s644 + $0x8] sm:$0xf]
      %v648 = vld [vmem:[%s644 + $0xc] sm:$0xf]
      %v653 = vunpack.c.l.b16 %v645
      %v654 = vunpack.c.l.b16 %v646
      %v655 = vunpack.c.l.b16 %v647
      %v656 = vunpack.c.l.b16 %v648
      %v657 = vpack.c.b16 %v654, %v653
      %v658 = vpack.c.b16 %v656, %v655
      %v663 = vunpack.c.l.b16 %v640
      %v664 = vunpack.c.h.b16 %v640
      %v665 = vunpack.c.l.b16 %v641
      %v666 = vunpack.c.l.b16 %v642
      %v667 = vunpack.c.h.b16 %v642
      %v668 = vunpack.c.l.b16 %v643
      %v669 = vpack.c.b16 %v666, %v663
      %v670 = vpack.c.b16 %v667, %v664
      %v671 = vpack.c.b16 %v668, %v665
      %672 = vrot.lane.b32.xlu0 %v669, 126
      %v673 = vpop.permute.xlu0 %672
      %674 = vrot.lane.b32.xlu0 %v670, 126
      %v675 = vpop.permute.xlu0 %674
      %676 = vrot.lane.b32.xlu0 %v671, 126
      %v677 = vpop.permute.xlu0 %676
      %vm678 = vcmask 1031168
      %v679 = vsel %vm678, %v673, %v675
      %v680 = vsel %vm678, %v675, %v677
      %v684 = vsel %vm445, %v657, 0
      %v687 = vsel %vm445, %v658, 0
      %689 = vmatprep.subr.bf16.mxu0 0
      %690 = vmatpush1.bf16.msra.mxu0 0
      %691 = vmatprep.subr.bf16.mxu0 0
      %692 = vmatpush1.bf16.msra.mxu0 0
      %693 = vmatprep.subr.bf16.mxu0 0
      %694 = vmatpush1.bf16.msra.mxu0 0
      %695 = vmatprep.subr.bf16.mxu0 0
      %696 = vmatpush1.bf16.msra.mxu0 0
      %697 = vmatprep.subr.bf16.mxu0 0
      %698 = vmatpush1.bf16.msra.mxu0 0
      %699 = vmatprep.subr.bf16.mxu0 0
      %700 = vmatpush1.bf16.msra.mxu0 0
      %701 = vmatprep.subr.bf16.mxu0 0
      %702 = vmatpush1.bf16.msra.mxu0 0
      %703 = vmatprep.subr.bf16.mxu0 %v680
      %704 = vmatpush1.bf16.msra.mxu0 %v679
      %705 = vmatprep.subr.bf16.mxu0 0
      %706 = vmatpush2.bf16.msra.mxu0 0
      %707 = vmatprep.subr.bf16.mxu0 0
      %708 = vmatpush2.bf16.msra.mxu0 0
      %709 = vmatprep.subr.bf16.mxu0 0
      %710 = vmatpush2.bf16.msra.mxu0 0
      %711 = vmatprep.subr.bf16.mxu0 0
      %712 = vmatpush2.bf16.msra.mxu0 0
      %713 = vmatprep.subr.bf16.mxu0 0
      %714 = vmatpush2.bf16.msra.mxu0 0
      %715 = vmatprep.subr.bf16.mxu0 0
      %716 = vmatpush2.bf16.msra.mxu0 0
      %717 = vmatprep.subr.bf16.mxu0 0
      %718 = vmatpush2.bf16.msra.mxu0 0
      %719 = vmatprep.subr.bf16.mxu0 0
      %720 = vmatpush2.bf16.msra.mxu0 0
      %721 = vmatprep.mubr.bf16.mxu0 0
      %722 = vmatmul.mubr.bf16.gmra.mxu0 %v684
      %v723 = vpop.f32.mrf.mxu0
      %v724 = vadd.f32 0.0, %v723
      %v725 = vpop.f32.mrf.mxu0
      %v726 = vadd.f32 0.0, %v725
      %v727 = vpop.f32.mrf.mxu0
      %v728 = vadd.f32 0.0, %v727
      %v729 = vpop.f32.mrf.mxu0
      %v730 = vadd.f32 0.0, %v729
      %731 = vmatprep.mubr.bf16.mxu0 0
      %732 = vmatmul.mubr.bf16.gmra.mxu0 %v687
      %v733 = vpop.f32.mrf.mxu0
      %v734 = vadd.f32 0.0, %v733
      %v735 = vpop.f32.mrf.mxu0
      %v736 = vadd.f32 0.0, %v735
      %v737 = vpop.f32.mrf.mxu0
      %v738 = vadd.f32 0.0, %v737
      %v739 = vpop.f32.mrf.mxu0
      %v740 = vadd.f32 0.0, %v739
      %741 = vdwg.mxu0
      %v742 = vadd.f32 %v611, %v724
      %v743 = vadd.f32 %v612, %v726
      %v744 = vadd.f32 %v613, %v728
      %v745 = vadd.f32 %v614, %v730
      %v746 = vadd.f32 %v615, %v734
      %v747 = vadd.f32 %v616, %v736
      %v748 = vadd.f32 %v617, %v738
      %v749 = vadd.f32 %v618, %v740
      %v750 = vsel %vm418, 65537, 0
      %751 = vrot.lane.b32.xlu0 %v750, 16
      %v752 = vpop.permute.xlu0 %751
      %v753 = vrot.slane %v752, 4
      %vm754 = vcmask 130048
      %v755 = vsel %vm754, %v753, %v752
      %vm756 = vcmp.ne.s16.totalorder %v755, 0
      %vm757 = vcmp.ne.s16.totalorder %v753, 0
      %v758 = vsel %vm756, %v367, 0
      %v759 = vsel %vm757, %v368, 0
      %v760 = vsel %vm756, %v369, 0
      %v761 = vsel %vm757, %v370, 0
      %s762 = scalar_lea.vmem %s324, 48
      %v763 = vld [vmem:[%s762] sm:$0xf]
      %v764 = vld [vmem:[%s762 + $0x4] sm:$0xf]
      %v765 = vld [vmem:[%s762 + $0x8] sm:$0xf]
      %v766 = vld [vmem:[%s762 + $0xc] sm:$0xf]
      %v771 = vunpack.c.l.b16 %v763
      %v772 = vunpack.c.l.b16 %v764
      %v773 = vunpack.c.l.b16 %v765
      %v774 = vunpack.c.l.b16 %v766
      %v775 = vpack.c.b16 %v772, %v771
      %v776 = vpack.c.b16 %v774, %v773
      %v781 = vunpack.c.l.b16 %v758
      %v782 = vunpack.c.h.b16 %v758
      %v783 = vunpack.c.l.b16 %v759
      %v784 = vunpack.c.l.b16 %v760
      %v785 = vunpack.c.h.b16 %v760
      %v786 = vunpack.c.l.b16 %v761
      %v787 = vpack.c.b16 %v784, %v781
      %v788 = vpack.c.b16 %v785, %v782
      %v789 = vpack.c.b16 %v786, %v783
      %790 = vrot.lane.b32.xlu0 %v787, 112
      %v791 = vpop.permute.xlu0 %790
      %792 = vrot.lane.b32.xlu0 %v788, 112
      %v793 = vpop.permute.xlu0 %792
      %794 = vrot.lane.b32.xlu0 %v789, 112
      %v795 = vpop.permute.xlu0 %794
      %vm796 = vcmask 916480
      %v797 = vsel %vm796, %v791, %v793
      %v798 = vsel %vm796, %v793, %v795
      %v802 = vsel %vm445, %v775, 0
      %v805 = vsel %vm445, %v776, 0
      %807 = vmatprep.subr.bf16.mxu0 0
      %808 = vmatpush1.bf16.msra.mxu0 0
      %809 = vmatprep.subr.bf16.mxu0 0
      %810 = vmatpush1.bf16.msra.mxu0 0
      %811 = vmatprep.subr.bf16.mxu0 0
      %812 = vmatpush1.bf16.msra.mxu0 0
      %813 = vmatprep.subr.bf16.mxu0 0
      %814 = vmatpush1.bf16.msra.mxu0 0
      %815 = vmatprep.subr.bf16.mxu0 0
      %816 = vmatpush1.bf16.msra.mxu0 0
      %817 = vmatprep.subr.bf16.mxu0 0
      %818 = vmatpush1.bf16.msra.mxu0 0
      %819 = vmatprep.subr.bf16.mxu0 0
      %820 = vmatpush1.bf16.msra.mxu0 0
      %821 = vmatprep.subr.bf16.mxu0 %v798
      %822 = vmatpush1.bf16.msra.mxu0 %v797
      %823 = vmatprep.subr.bf16.mxu0 0
      %824 = vmatpush2.bf16.msra.mxu0 0
      %825 = vmatprep.subr.bf16.mxu0 0
      %826 = vmatpush2.bf16.msra.mxu0 0
      %827 = vmatprep.subr.bf16.mxu0 0
      %828 = vmatpush2.bf16.msra.mxu0 0
      %829 = vmatprep.subr.bf16.mxu0 0
      %830 = vmatpush2.bf16.msra.mxu0 0
      %831 = vmatprep.subr.bf16.mxu0 0
      %832 = vmatpush2.bf16.msra.mxu0 0
      %833 = vmatprep.subr.bf16.mxu0 0
      %834 = vmatpush2.bf16.msra.mxu0 0
      %835 = vmatprep.subr.bf16.mxu0 0
      %836 = vmatpush2.bf16.msra.mxu0 0
      %837 = vmatprep.subr.bf16.mxu0 0
      %838 = vmatpush2.bf16.msra.mxu0 0
      %839 = vmatprep.mubr.bf16.mxu0 0
      %840 = vmatmul.mubr.bf16.gmra.mxu0 %v802
      %v841 = vpop.f32.mrf.mxu0
      %v842 = vadd.f32 0.0, %v841
      %v843 = vpop.f32.mrf.mxu0
      %v844 = vadd.f32 0.0, %v843
      %v845 = vpop.f32.mrf.mxu0
      %v846 = vadd.f32 0.0, %v845
      %v847 = vpop.f32.mrf.mxu0
      %v848 = vadd.f32 0.0, %v847
      %849 = vmatprep.mubr.bf16.mxu0 0
      %850 = vmatmul.mubr.bf16.gmra.mxu0 %v805
      %v851 = vpop.f32.mrf.mxu0
      %v852 = vadd.f32 0.0, %v851
      %v853 = vpop.f32.mrf.mxu0
      %v854 = vadd.f32 0.0, %v853
      %v855 = vpop.f32.mrf.mxu0
      %v856 = vadd.f32 0.0, %v855
      %v857 = vpop.f32.mrf.mxu0
      %v858 = vadd.f32 0.0, %v857
      %859 = vdwg.mxu0
      %v860 = vadd.f32 %v742, %v842
      %v861 = vadd.f32 %v743, %v844
      %v862 = vadd.f32 %v744, %v846
      %v863 = vadd.f32 %v745, %v848
      %v864 = vadd.f32 %v746, %v852
      %v865 = vadd.f32 %v747, %v854
      %v866 = vadd.f32 %v748, %v856
      %v867 = vadd.f32 %v749, %v858
      %s868 = scalar_lea.vmem %s324, 64
      %v869 = vld [vmem:[%s868] sm:$0xf]
      %v870 = vld [vmem:[%s868 + $0x4] sm:$0xf]
      %v871 = vld [vmem:[%s868 + $0x8] sm:$0xf]
      %v872 = vld [vmem:[%s868 + $0xc] sm:$0xf]
      %v877 = vunpack.c.l.b16 %v869
      %v878 = vunpack.c.l.b16 %v870
      %v879 = vunpack.c.l.b16 %v871
      %v880 = vunpack.c.l.b16 %v872
      %v881 = vpack.c.b16 %v878, %v877
      %v882 = vpack.c.b16 %v880, %v879
      %883 = vrot.lane.b32.xlu0 %v538, 111
      %v884 = vpop.permute.xlu0 %883
      %885 = vrot.lane.b32.xlu0 %v539, 111
      %v886 = vpop.permute.xlu0 %885
      %887 = vrot.lane.b32.xlu0 %v540, 111
      %v888 = vpop.permute.xlu0 %887
      %vm889 = vcmask 908288
      %v890 = vsel %vm889, %v884, %v886
      %v891 = vsel %vm889, %v886, %v888
      %v895 = vsel %vm445, %v881, 0
      %v898 = vsel %vm445, %v882, 0
      %900 = vmatprep.subr.bf16.mxu0 0
      %901 = vmatpush1.bf16.msra.mxu0 0
      %902 = vmatprep.subr.bf16.mxu0 0
      %903 = vmatpush1.bf16.msra.mxu0 0
      %904 = vmatprep.subr.bf16.mxu0 0
      %905 = vmatpush1.bf16.msra.mxu0 0
      %906 = vmatprep.subr.bf16.mxu0 0
      %907 = vmatpush1.bf16.msra.mxu0 0
      %908 = vmatprep.subr.bf16.mxu0 0
      %909 = vmatpush1.bf16.msra.mxu0 0
      %910 = vmatprep.subr.bf16.mxu0 0
      %911 = vmatpush1.bf16.msra.mxu0 0
      %912 = vmatprep.subr.bf16.mxu0 0
      %913 = vmatpush1.bf16.msra.mxu0 0
      %914 = vmatprep.subr.bf16.mxu0 %v891
      %915 = vmatpush1.bf16.msra.mxu0 %v890
      %916 = vmatprep.subr.bf16.mxu0 0
      %917 = vmatpush2.bf16.msra.mxu0 0
      %918 = vmatprep.subr.bf16.mxu0 0
      %919 = vmatpush2.bf16.msra.mxu0 0
      %920 = vmatprep.subr.bf16.mxu0 0
      %921 = vmatpush2.bf16.msra.mxu0 0
      %922 = vmatprep.subr.bf16.mxu0 0
      %923 = vmatpush2.bf16.msra.mxu0 0
      %924 = vmatprep.subr.bf16.mxu0 0
      %925 = vmatpush2.bf16.msra.mxu0 0
      %926 = vmatprep.subr.bf16.mxu0 0
      %927 = vmatpush2.bf16.msra.mxu0 0
      %928 = vmatprep.subr.bf16.mxu0 0
      %929 = vmatpush2.bf16.msra.mxu0 0
      %930 = vmatprep.subr.bf16.mxu0 0
      %931 = vmatpush2.bf16.msra.mxu0 0
      %932 = vmatprep.mubr.bf16.mxu0 0
      %933 = vmatmul.mubr.bf16.gmra.mxu0 %v895
      %v934 = vpop.f32.mrf.mxu0
      %v935 = vadd.f32 0.0, %v934
      %v936 = vpop.f32.mrf.mxu0
      %v937 = vadd.f32 0.0, %v936
      %v938 = vpop.f32.mrf.mxu0
      %v939 = vadd.f32 0.0, %v938
      %v940 = vpop.f32.mrf.mxu0
      %v941 = vadd.f32 0.0, %v940
      %942 = vmatprep.mubr.bf16.mxu0 0
      %943 = vmatmul.mubr.bf16.gmra.mxu0 %v898
      %v944 = vpop.f32.mrf.mxu0
      %v945 = vadd.f32 0.0, %v944
      %v946 = vpop.f32.mrf.mxu0
      %v947 = vadd.f32 0.0, %v946
      %v948 = vpop.f32.mrf.mxu0
      %v949 = vadd.f32 0.0, %v948
      %v950 = vpop.f32.mrf.mxu0
      %v951 = vadd.f32 0.0, %v950
      %952 = vdwg.mxu0
      %v953 = vadd.f32 %v860, %v935
      %v954 = vadd.f32 %v861, %v937
      %v955 = vadd.f32 %v862, %v939
      %v956 = vadd.f32 %v863, %v941
      %v957 = vadd.f32 %v864, %v945
      %v958 = vadd.f32 %v865, %v947
      %v959 = vadd.f32 %v866, %v949
      %v960 = vadd.f32 %v867, %v951
      %961 = vrot.lane.b32.xlu0 %v632, 18
      %v962 = vpop.permute.xlu0 %961
      %v963 = vrot.slane %v962, 4
      %vm964 = vcmask 146432
      %v965 = vsel %vm964, %v963, %v962
      %vm966 = vcmp.ne.s16.totalorder %v965, 0
      %vm967 = vcmp.ne.s16.totalorder %v963, 0
      %v968 = vsel %vm966, %v367, 0
      %v969 = vsel %vm967, %v368, 0
      %v970 = vsel %vm966, %v369, 0
      %v971 = vsel %vm967, %v370, 0
      %s972 = scalar_lea.vmem %s324, 80
      %v973 = vld [vmem:[%s972] sm:$0xf]
      %v974 = vld [vmem:[%s972 + $0x4] sm:$0xf]
      %v975 = vld [vmem:[%s972 + $0x8] sm:$0xf]
      %v976 = vld [vmem:[%s972 + $0xc] sm:$0xf]
      %v981 = vunpack.c.l.b16 %v973
      %v982 = vunpack.c.l.b16 %v974
      %v983 = vunpack.c.l.b16 %v975
      %v984 = vunpack.c.l.b16 %v976
      %v985 = vpack.c.b16 %v982, %v981
      %v986 = vpack.c.b16 %v984, %v983
      %v991 = vunpack.c.l.b16 %v968
      %v992 = vunpack.c.h.b16 %v968
      %v993 = vunpack.c.l.b16 %v969
      %v994 = vunpack.c.l.b16 %v970
      %v995 = vunpack.c.h.b16 %v970
      %v996 = vunpack.c.l.b16 %v971
      %v997 = vpack.c.b16 %v994, %v991
      %v998 = vpack.c.b16 %v995, %v992
      %v999 = vpack.c.b16 %v996, %v993
      %1000 = vrot.lane.b32.xlu0 %v997, 110
      %v1001 = vpop.permute.xlu0 %1000
      %1002 = vrot.lane.b32.xlu0 %v998, 110
      %v1003 = vpop.permute.xlu0 %1002
      %1004 = vrot.lane.b32.xlu0 %v999, 110
      %v1005 = vpop.permute.xlu0 %1004
      %vm1006 = vcmask 900096
      %v1007 = vsel %vm1006, %v1001, %v1003
      %v1008 = vsel %vm1006, %v1003, %v1005
      %v1012 = vsel %vm445, %v985, 0
      %v1015 = vsel %vm445, %v986, 0
      %1017 = vmatprep.subr.bf16.mxu0 0
      %1018 = vmatpush1.bf16.msra.mxu0 0
      %1019 = vmatprep.subr.bf16.mxu0 0
      %1020 = vmatpush1.bf16.msra.mxu0 0
      %1021 = vmatprep.subr.bf16.mxu0 0
      %1022 = vmatpush1.bf16.msra.mxu0 0
      %1023 = vmatprep.subr.bf16.mxu0 0
      %1024 = vmatpush1.bf16.msra.mxu0 0
      %1025 = vmatprep.subr.bf16.mxu0 0
      %1026 = vmatpush1.bf16.msra.mxu0 0
      %1027 = vmatprep.subr.bf16.mxu0 0
      %1028 = vmatpush1.bf16.msra.mxu0 0
      %1029 = vmatprep.subr.bf16.mxu0 0
      %1030 = vmatpush1.bf16.msra.mxu0 0
      %1031 = vmatprep.subr.bf16.mxu0 %v1008
      %1032 = vmatpush1.bf16.msra.mxu0 %v1007
      %1033 = vmatprep.subr.bf16.mxu0 0
      %1034 = vmatpush2.bf16.msra.mxu0 0
      %1035 = vmatprep.subr.bf16.mxu0 0
      %1036 = vmatpush2.bf16.msra.mxu0 0
      %1037 = vmatprep.subr.bf16.mxu0 0
      %1038 = vmatpush2.bf16.msra.mxu0 0
      %1039 = vmatprep.subr.bf16.mxu0 0
      %1040 = vmatpush2.bf16.msra.mxu0 0
      %1041 = vmatprep.subr.bf16.mxu0 0
      %1042 = vmatpush2.bf16.msra.mxu0 0
      %1043 = vmatprep.subr.bf16.mxu0 0
      %1044 = vmatpush2.bf16.msra.mxu0 0
      %1045 = vmatprep.subr.bf16.mxu0 0
      %1046 = vmatpush2.bf16.msra.mxu0 0
      %1047 = vmatprep.subr.bf16.mxu0 0
      %1048 = vmatpush2.bf16.msra.mxu0 0
      %1049 = vmatprep.mubr.bf16.mxu0 0
      %1050 = vmatmul.mubr.bf16.gmra.mxu0 %v1012
      %v1051 = vpop.f32.mrf.mxu0
      %v1052 = vadd.f32 0.0, %v1051
      %v1053 = vpop.f32.mrf.mxu0
      %v1054 = vadd.f32 0.0, %v1053
      %v1055 = vpop.f32.mrf.mxu0
      %v1056 = vadd.f32 0.0, %v1055
      %v1057 = vpop.f32.mrf.mxu0
      %v1058 = vadd.f32 0.0, %v1057
      %1059 = vmatprep.mubr.bf16.mxu0 0
      %1060 = vmatmul.mubr.bf16.gmra.mxu0 %v1015
      %v1061 = vpop.f32.mrf.mxu0
      %v1062 = vadd.f32 0.0, %v1061
      %v1063 = vpop.f32.mrf.mxu0
      %v1064 = vadd.f32 0.0, %v1063
      %v1065 = vpop.f32.mrf.mxu0
      %v1066 = vadd.f32 0.0, %v1065
      %v1067 = vpop.f32.mrf.mxu0
      %v1068 = vadd.f32 0.0, %v1067
      %1069 = vdwg.mxu0
      %v1070 = vadd.f32 %v953, %v1052
      %v1071 = vadd.f32 %v954, %v1054
      %v1072 = vadd.f32 %v955, %v1056
      %v1073 = vadd.f32 %v956, %v1058
      %v1074 = vadd.f32 %v957, %v1062
      %v1075 = vadd.f32 %v958, %v1064
      %v1076 = vadd.f32 %v959, %v1066
      %v1077 = vadd.f32 %v960, %v1068
      %1078 = vrot.lane.b32.xlu0 %v750, 32
      %v1079 = vpop.permute.xlu0 %1078
      %v1080 = vrot.slane %v1079, 4
      %vm1081 = vcmask 261120
      %v1082 = vsel %vm1081, %v1080, %v1079
      %vm1083 = vcmp.ne.s16.totalorder %v1082, 0
      %vm1084 = vcmp.ne.s16.totalorder %v1080, 0
      %v1085 = vsel %vm1083, %v367, 0
      %v1086 = vsel %vm1084, %v368, 0
      %v1087 = vsel %vm1083, %v369, 0
      %v1088 = vsel %vm1084, %v370, 0
      %s1089 = scalar_lea.vmem %s324, 96
      %v1090 = vld [vmem:[%s1089] sm:$0xf]
      %v1091 = vld [vmem:[%s1089 + $0x4] sm:$0xf]
      %v1092 = vld [vmem:[%s1089 + $0x8] sm:$0xf]
      %v1093 = vld [vmem:[%s1089 + $0xc] sm:$0xf]
      %v1098 = vunpack.c.l.b16 %v1090
      %v1099 = vunpack.c.l.b16 %v1091
      %v1100 = vunpack.c.l.b16 %v1092
      %v1101 = vunpack.c.l.b16 %v1093
      %v1102 = vpack.c.b16 %v1099, %v1098
      %v1103 = vpack.c.b16 %v1101, %v1100
      %v1108 = vunpack.c.l.b16 %v1085
      %v1109 = vunpack.c.h.b16 %v1085
      %v1110 = vunpack.c.l.b16 %v1086
      %v1111 = vunpack.c.l.b16 %v1087
      %v1112 = vunpack.c.h.b16 %v1087
      %v1113 = vunpack.c.l.b16 %v1088
      %v1114 = vpack.c.b16 %v1111, %v1108
      %v1115 = vpack.c.b16 %v1112, %v1109
      %v1116 = vpack.c.b16 %v1113, %v1110
      %1117 = vrot.lane.b32.xlu0 %v1114, 96
      %v1118 = vpop.permute.xlu0 %1117
      %1119 = vrot.lane.b32.xlu0 %v1115, 96
      %v1120 = vpop.permute.xlu0 %1119
      %1121 = vrot.lane.b32.xlu0 %v1116, 96
      %v1122 = vpop.permute.xlu0 %1121
      %vm1123 = vcmask 785408
      %v1124 = vsel %vm1123, %v1118, %v1120
      %v1125 = vsel %vm1123, %v1120, %v1122
      %v1129 = vsel %vm445, %v1102, 0
      %v1132 = vsel %vm445, %v1103, 0
      %1134 = vmatprep.subr.bf16.mxu0 0
      %1135 = vmatpush1.bf16.msra.mxu0 0
      %1136 = vmatprep.subr.bf16.mxu0 0
      %1137 = vmatpush1.bf16.msra.mxu0 0
      %1138 = vmatprep.subr.bf16.mxu0 0
      %1139 = vmatpush1.bf16.msra.mxu0 0
      %1140 = vmatprep.subr.bf16.mxu0 0
      %1141 = vmatpush1.bf16.msra.mxu0 0
      %1142 = vmatprep.subr.bf16.mxu0 0
      %1143 = vmatpush1.bf16.msra.mxu0 0
      %1144 = vmatprep.subr.bf16.mxu0 0
      %1145 = vmatpush1.bf16.msra.mxu0 0
      %1146 = vmatprep.subr.bf16.mxu0 0
      %1147 = vmatpush1.bf16.msra.mxu0 0
      %1148 = vmatprep.subr.bf16.mxu0 %v1125
      %1149 = vmatpush1.bf16.msra.mxu0 %v1124
      %1150 = vmatprep.subr.bf16.mxu0 0
      %1151 = vmatpush2.bf16.msra.mxu0 0
      %1152 = vmatprep.subr.bf16.mxu0 0
      %1153 = vmatpush2.bf16.msra.mxu0 0
      %1154 = vmatprep.subr.bf16.mxu0 0
      %1155 = vmatpush2.bf16.msra.mxu0 0
      %1156 = vmatprep.subr.bf16.mxu0 0
      %1157 = vmatpush2.bf16.msra.mxu0 0
      %1158 = vmatprep.subr.bf16.mxu0 0
      %1159 = vmatpush2.bf16.msra.mxu0 0
      %1160 = vmatprep.subr.bf16.mxu0 0
      %1161 = vmatpush2.bf16.msra.mxu0 0
      %1162 = vmatprep.subr.bf16.mxu0 0
      %1163 = vmatpush2.bf16.msra.mxu0 0
      %1164 = vmatprep.subr.bf16.mxu0 0
      %1165 = vmatpush2.bf16.msra.mxu0 0
      %1166 = vmatprep.mubr.bf16.mxu0 0
      %1167 = vmatmul.mubr.bf16.gmra.mxu0 %v1129
      %v1168 = vpop.f32.mrf.mxu0
      %v1169 = vadd.f32 0.0, %v1168
      %v1170 = vpop.f32.mrf.mxu0
      %v1171 = vadd.f32 0.0, %v1170
      %v1172 = vpop.f32.mrf.mxu0
      %v1173 = vadd.f32 0.0, %v1172
      %v1174 = vpop.f32.mrf.mxu0
      %v1175 = vadd.f32 0.0, %v1174
      %1176 = vmatprep.mubr.bf16.mxu0 0
      %1177 = vmatmul.mubr.bf16.gmra.mxu0 %v1132
      %v1178 = vpop.f32.mrf.mxu0
      %v1179 = vadd.f32 0.0, %v1178
      %v1180 = vpop.f32.mrf.mxu0
      %v1181 = vadd.f32 0.0, %v1180
      %v1182 = vpop.f32.mrf.mxu0
      %v1183 = vadd.f32 0.0, %v1182
      %v1184 = vpop.f32.mrf.mxu0
      %v1185 = vadd.f32 0.0, %v1184
      %1186 = vdwg.mxu0
      %v1187 = vadd.f32 %v1070, %v1169
      %v1188 = vadd.f32 %v1071, %v1171
      %v1189 = vadd.f32 %v1072, %v1173
      %v1190 = vadd.f32 %v1073, %v1175
      %v1191 = vadd.f32 %v1074, %v1179
      %v1192 = vadd.f32 %v1075, %v1181
      %v1193 = vadd.f32 %v1076, %v1183
      %v1194 = vadd.f32 %v1077, %v1185
      %s1195 = scalar_lea.vmem %s324, 112
      %v1196 = vld [vmem:[%s1195] sm:$0xf]
      %v1197 = vld [vmem:[%s1195 + $0x4] sm:$0xf]
      %v1198 = vld [vmem:[%s1195 + $0x8] sm:$0xf]
      %v1199 = vld [vmem:[%s1195 + $0xc] sm:$0xf]
      %v1204 = vunpack.c.l.b16 %v1196
      %v1205 = vunpack.c.l.b16 %v1197
      %v1206 = vunpack.c.l.b16 %v1198
      %v1207 = vunpack.c.l.b16 %v1199
      %v1208 = vpack.c.b16 %v1205, %v1204
      %v1209 = vpack.c.b16 %v1207, %v1206
      %1210 = vrot.lane.b32.xlu0 %v538, 95
      %v1211 = vpop.permute.xlu0 %1210
      %1212 = vrot.lane.b32.xlu0 %v539, 95
      %v1213 = vpop.permute.xlu0 %1212
      %1214 = vrot.lane.b32.xlu0 %v540, 95
      %v1215 = vpop.permute.xlu0 %1214
      %vm1216 = vcmask 777216
      %v1217 = vsel %vm1216, %v1211, %v1213
      %v1218 = vsel %vm1216, %v1213, %v1215
      %v1222 = vsel %vm445, %v1208, 0
      %v1225 = vsel %vm445, %v1209, 0
      %1227 = vmatprep.subr.bf16.mxu0 0
      %1228 = vmatpush1.bf16.msra.mxu0 0
      %1229 = vmatprep.subr.bf16.mxu0 0
      %1230 = vmatpush1.bf16.msra.mxu0 0
      %1231 = vmatprep.subr.bf16.mxu0 0
      %1232 = vmatpush1.bf16.msra.mxu0 0
      %1233 = vmatprep.subr.bf16.mxu0 0
      %1234 = vmatpush1.bf16.msra.mxu0 0
      %1235 = vmatprep.subr.bf16.mxu0 0
      %1236 = vmatpush1.bf16.msra.mxu0 0
      %1237 = vmatprep.subr.bf16.mxu0 0
      %1238 = vmatpush1.bf16.msra.mxu0 0
      %1239 = vmatprep.subr.bf16.mxu0 0
      %1240 = vmatpush1.bf16.msra.mxu0 0
      %1241 = vmatprep.subr.bf16.mxu0 %v1218
      %1242 = vmatpush1.bf16.msra.mxu0 %v1217
      %1243 = vmatprep.subr.bf16.mxu0 0
      %1244 = vmatpush2.bf16.msra.mxu0 0
      %1245 = vmatprep.subr.bf16.mxu0 0
      %1246 = vmatpush2.bf16.msra.mxu0 0
      %1247 = vmatprep.subr.bf16.mxu0 0
      %1248 = vmatpush2.bf16.msra.mxu0 0
      %1249 = vmatprep.subr.bf16.mxu0 0
      %1250 = vmatpush2.bf16.msra.mxu0 0
      %1251 = vmatprep.subr.bf16.mxu0 0
      %1252 = vmatpush2.bf16.msra.mxu0 0
      %1253 = vmatprep.subr.bf16.mxu0 0
      %1254 = vmatpush2.bf16.msra.mxu0 0
      %1255 = vmatprep.subr.bf16.mxu0 0
      %1256 = vmatpush2.bf16.msra.mxu0 0
      %1257 = vmatprep.subr.bf16.mxu0 0
      %1258 = vmatpush2.bf16.msra.mxu0 0
      %1259 = vmatprep.mubr.bf16.mxu0 0
      %1260 = vmatmul.mubr.bf16.gmra.mxu0 %v1222
      %v1261 = vpop.f32.mrf.mxu0
      %v1262 = vadd.f32 0.0, %v1261
      %v1263 = vpop.f32.mrf.mxu0
      %v1264 = vadd.f32 0.0, %v1263
      %v1265 = vpop.f32.mrf.mxu0
      %v1266 = vadd.f32 0.0, %v1265
      %v1267 = vpop.f32.mrf.mxu0
      %v1268 = vadd.f32 0.0, %v1267
      %1269 = vmatprep.mubr.bf16.mxu0 0
      %1270 = vmatmul.mubr.bf16.gmra.mxu0 %v1225
      %v1271 = vpop.f32.mrf.mxu0
      %v1272 = vadd.f32 0.0, %v1271
      %v1273 = vpop.f32.mrf.mxu0
      %v1274 = vadd.f32 0.0, %v1273
      %v1275 = vpop.f32.mrf.mxu0
      %v1276 = vadd.f32 0.0, %v1275
      %v1277 = vpop.f32.mrf.mxu0
      %v1278 = vadd.f32 0.0, %v1277
      %1279 = vdwg.mxu0
      %v1280 = vadd.f32 %v1187, %v1262
      %v1281 = vadd.f32 %v1188, %v1264
      %v1282 = vadd.f32 %v1189, %v1266
      %v1283 = vadd.f32 %v1190, %v1268
      %v1284 = vadd.f32 %v1191, %v1272
      %v1285 = vadd.f32 %v1192, %v1274
      %v1286 = vadd.f32 %v1193, %v1276
      %v1287 = vadd.f32 %v1194, %v1278
      %1288 = vrot.lane.b32.xlu0 %v632, 34
      %v1289 = vpop.permute.xlu0 %1288
      %v1290 = vrot.slane %v1289, 4
      %vm1291 = vcmask 277504
      %v1292 = vsel %vm1291, %v1290, %v1289
      %vm1293 = vcmp.ne.s16.totalorder %v1292, 0
      %vm1294 = vcmp.ne.s16.totalorder %v1290, 0
      %v1295 = vsel %vm1293, %v367, 0
      %v1296 = vsel %vm1294, %v368, 0
      %v1297 = vsel %vm1293, %v369, 0
      %v1298 = vsel %vm1294, %v370, 0
      %s1299 = scalar_lea.vmem %s324, 128
      %v1300 = vld [vmem:[%s1299] sm:$0xf]
      %v1301 = vld [vmem:[%s1299 + $0x4] sm:$0xf]
      %v1302 = vld [vmem:[%s1299 + $0x8] sm:$0xf]
      %v1303 = vld [vmem:[%s1299 + $0xc] sm:$0xf]
      %v1308 = vunpack.c.l.b16 %v1300
      %v1309 = vunpack.c.l.b16 %v1301
      %v1310 = vunpack.c.l.b16 %v1302
      %v1311 = vunpack.c.l.b16 %v1303
      %v1312 = vpack.c.b16 %v1309, %v1308
      %v1313 = vpack.c.b16 %v1311, %v1310
      %v1318 = vunpack.c.l.b16 %v1295
      %v1319 = vunpack.c.h.b16 %v1295
      %v1320 = vunpack.c.l.b16 %v1296
      %v1321 = vunpack.c.l.b16 %v1297
      %v1322 = vunpack.c.h.b16 %v1297
      %v1323 = vunpack.c.l.b16 %v1298
      %v1324 = vpack.c.b16 %v1321, %v1318
      %v1325 = vpack.c.b16 %v1322, %v1319
      %v1326 = vpack.c.b16 %v1323, %v1320
      %1327 = vrot.lane.b32.xlu0 %v1324, 94
      %v1328 = vpop.permute.xlu0 %1327
      %1329 = vrot.lane.b32.xlu0 %v1325, 94
      %v1330 = vpop.permute.xlu0 %1329
      %1331 = vrot.lane.b32.xlu0 %v1326, 94
      %v1332 = vpop.permute.xlu0 %1331
      %vm1333 = vcmask 769024
      %v1334 = vsel %vm1333, %v1328, %v1330
      %v1335 = vsel %vm1333, %v1330, %v1332
      %v1339 = vsel %vm445, %v1312, 0
      %v1342 = vsel %vm445, %v1313, 0
      %1344 = vmatprep.subr.bf16.mxu0 0
      %1345 = vmatpush1.bf16.msra.mxu0 0
      %1346 = vmatprep.subr.bf16.mxu0 0
      %1347 = vmatpush1.bf16.msra.mxu0 0
      %1348 = vmatprep.subr.bf16.mxu0 0
      %1349 = vmatpush1.bf16.msra.mxu0 0
      %1350 = vmatprep.subr.bf16.mxu0 0
      %1351 = vmatpush1.bf16.msra.mxu0 0
      %1352 = vmatprep.subr.bf16.mxu0 0
      %1353 = vmatpush1.bf16.msra.mxu0 0
      %1354 = vmatprep.subr.bf16.mxu0 0
      %1355 = vmatpush1.bf16.msra.mxu0 0
      %1356 = vmatprep.subr.bf16.mxu0 0
      %1357 = vmatpush1.bf16.msra.mxu0 0
      %1358 = vmatprep.subr.bf16.mxu0 %v1335
      %1359 = vmatpush1.bf16.msra.mxu0 %v1334
      %1360 = vmatprep.subr.bf16.mxu0 0
      %1361 = vmatpush2.bf16.msra.mxu0 0
      %1362 = vmatprep.subr.bf16.mxu0 0
      %1363 = vmatpush2.bf16.msra.mxu0 0
      %1364 = vmatprep.subr.bf16.mxu0 0
      %1365 = vmatpush2.bf16.msra.mxu0 0
      %1366 = vmatprep.subr.bf16.mxu0 0
      %1367 = vmatpush2.bf16.msra.mxu0 0
      %1368 = vmatprep.subr.bf16.mxu0 0
      %1369 = vmatpush2.bf16.msra.mxu0 0
      %1370 = vmatprep.subr.bf16.mxu0 0
      %1371 = vmatpush2.bf16.msra.mxu0 0
      %1372 = vmatprep.subr.bf16.mxu0 0
      %1373 = vmatpush2.bf16.msra.mxu0 0
      %1374 = vmatprep.subr.bf16.mxu0 0
      %1375 = vmatpush2.bf16.msra.mxu0 0
      %1376 = vmatprep.mubr.bf16.mxu0 0
      %1377 = vmatmul.mubr.bf16.gmra.mxu0 %v1339
      %v1378 = vpop.f32.mrf.mxu0
      %v1379 = vadd.f32 0.0, %v1378
      %v1380 = vpop.f32.mrf.mxu0
      %v1381 = vadd.f32 0.0, %v1380
      %v1382 = vpop.f32.mrf.mxu0
      %v1383 = vadd.f32 0.0, %v1382
      %v1384 = vpop.f32.mrf.mxu0
      %v1385 = vadd.f32 0.0, %v1384
      %1386 = vmatprep.mubr.bf16.mxu0 0
      %1387 = vmatmul.mubr.bf16.gmra.mxu0 %v1342
      %v1388 = vpop.f32.mrf.mxu0
      %v1389 = vadd.f32 0.0, %v1388
      %v1390 = vpop.f32.mrf.mxu0
      %v1391 = vadd.f32 0.0, %v1390
      %v1392 = vpop.f32.mrf.mxu0
      %v1393 = vadd.f32 0.0, %v1392
      %v1394 = vpop.f32.mrf.mxu0
      %v1395 = vadd.f32 0.0, %v1394
      %1396 = vdwg.mxu0
      %v1397 = vadd.f32 %v1280, %v1379
      %v1398 = vadd.f32 %v1281, %v1381
      %v1399 = vadd.f32 %v1282, %v1383
      %v1400 = vadd.f32 %v1283, %v1385
      %v1401 = vadd.f32 %v1284, %v1389
      %v1402 = vadd.f32 %v1285, %v1391
      %v1403 = vadd.f32 %v1286, %v1393
      %v1404 = vadd.f32 %v1287, %v1395
      %1405 = vst [vmem:[#allocation2] sm:$0xff] %v1397
      %1406 = vst [vmem:[#allocation2 + $0x8] sm:$0xff] %v1398
      %1407 = vst [vmem:[#allocation2 + $0x10] sm:$0xff] %v1399
      %1408 = vst [vmem:[#allocation2 + $0x18] sm:$0xff] %v1400
      %1409 = vst [vmem:[#allocation2 + $0x20] sm:$0xff] %v1401
      %1410 = vst [vmem:[#allocation2 + $0x28] sm:$0xff] %v1402
      %1411 = vst [vmem:[#allocation2 + $0x30] sm:$0xff] %v1403
      %1412 = vst [vmem:[#allocation2 + $0x38] sm:$0xff] %v1404
      %p1413 = scmp.eq.s32.totalorder %s24, 2
      // Predicated region
      $region41: #{conv_lstm_cell_3d.1} parent=35 // pred_check
        %p1414 = pneg %p1413
      $region42: #{conv_lstm_cell_3d.1} parent=35 // pred_check_branch
        %1416 = sbr.rel (%p1414) target = $region44
      $region43: #{conv_lstm_cell_3d.1} parent=35 // pred_region
        %v1417 = vld [vmem:[#allocation2] sm:$0xff]
        %v1418 = vld [vmem:[#allocation2 + $0x8] sm:$0xff]
        %v1419 = vld [vmem:[#allocation2 + $0x10] sm:$0xff]
        %v1420 = vld [vmem:[#allocation2 + $0x18] sm:$0xff]
        %v1421 = vld [vmem:[#allocation2 + $0x20] sm:$0xff]
        %v1422 = vld [vmem:[#allocation2 + $0x28] sm:$0xff]
        %v1423 = vld [vmem:[#allocation2 + $0x30] sm:$0xff]
        %v1424 = vld [vmem:[#allocation2 + $0x38] sm:$0xff]
        %v1425 = vld [vmem:[%s2] sm:$0xff]
        %v1426 = vld [vmem:[%s2 + $0x8] sm:$0xff]
        %v1427 = vld [vmem:[%s2 + $0x10] sm:$0xff]
        %v1428 = vld [vmem:[%s2 + $0x18] sm:$0xff]
        %1430 = vset.pattern.permute.xlu0 0
        %1431 = vperm.xlu0 %1430, %v1425
        %v1432 = vpop.permute.xlu0 %1431
        %1435 = vset.pattern.permute.xlu0 0
        %1436 = vperm.xlu0 %1435, %v1426
        %v1437 = vpop.permute.xlu0 %1436
        %1440 = vset.pattern.permute.xlu0 0
        %1441 = vperm.xlu0 %1440, %v1427
        %v1442 = vpop.permute.xlu0 %1441
        %1445 = vset.pattern.permute.xlu0 0
        %1446 = vperm.xlu0 %1445, %v1428
        %v1447 = vpop.permute.xlu0 %1446
        %v1449 = vadd.f32 %v1417, %v1432
        %v1450 = vadd.f32 %v1418, %v1432
        %v1451 = vadd.f32 %v1419, %v1437
        %v1452 = vadd.f32 %v1420, %v1437
        %v1453 = vadd.f32 %v1421, %v1442
        %v1454 = vadd.f32 %v1422, %v1442
        %v1455 = vadd.f32 %v1423, %v1447
        %v1456 = vadd.f32 %v1424, %v1447
        %v1457 = vxor.u32 %v1449, 2147483648
        %v1458 = vxor.u32 %v1450, 2147483648
        %v1459 = vmul.f32 %v1457, 1.442695
        %v1460 = vpow.pop %v1459
        %v1461 = vmul.f32 %v1458, 1.442695
        %v1462 = vpow.pop %v1461
        %v1463 = vadd.f32 %v1460, 1.0
        %v1464 = vadd.f32 %v1462, 1.0
        %v1465 = vrcp.pop %v1463
        %v1466 = vmul.f32 1.0, %v1465
        %v1467 = vrcp.pop %v1464
        %v1468 = vmul.f32 1.0, %v1467
        %v1469 = vxor.u32 %v1451, 2147483648
        %v1470 = vxor.u32 %v1452, 2147483648
        %v1471 = vmul.f32 %v1469, 1.442695
        %v1472 = vpow.pop %v1471
        %v1473 = vmul.f32 %v1470, 1.442695
        %v1474 = vpow.pop %v1473
        %v1475 = vadd.f32 %v1472, 1.0
        %v1476 = vadd.f32 %v1474, 1.0
        %v1477 = vrcp.pop %v1475
        %v1478 = vmul.f32 1.0, %v1477
        %v1479 = vrcp.pop %v1476
        %v1480 = vmul.f32 1.0, %v1479
        %v1481 = vxor.u32 %v1453, 2147483648
        %v1482 = vxor.u32 %v1454, 2147483648
        %v1483 = vmul.f32 %v1481, 1.442695
        %v1484 = vpow.pop %v1483
        %v1485 = vmul.f32 %v1482, 1.442695
        %v1486 = vpow.pop %v1485
        %v1487 = vadd.f32 %v1484, 1.0
        %v1488 = vadd.f32 %v1486, 1.0
        %v1489 = vrcp.pop %v1487
        %v1490 = vmul.f32 1.0, %v1489
        %v1491 = vrcp.pop %v1488
        %v1492 = vmul.f32 1.0, %v1491
        %v1493 = vtanh.pop %v1455
        %v1494 = vtanh.pop %v1456
        %v1495 = vld [vmem:[%s333] sm:$0xff]
        %v1496 = vld [vmem:[%s333 + $0x8] sm:$0xff]
        %v1497 = vmul.f32 %v1478, %v1495
        %v1498 = vmul.f32 %v1480, %v1496
        %v1499 = vmul.f32 %v1466, %v1493
        %v1500 = vmul.f32 %v1468, %v1494
        %v1501 = vadd.f32 %v1497, %v1499
        %v1502 = vadd.f32 %v1498, %v1500
        %v1503 = vtanh.pop %v1501
        %v1504 = vtanh.pop %v1502
        %v1505 = vmul.f32 %v1490, %v1503
        %v1506 = vmul.f32 %v1492, %v1504
        %1507 = vst [vmem:[%s351] sm:$0xff] %v1501
        %1508 = vst [vmem:[%s351 + $0x8] sm:$0xff] %v1502
        %1509 = vst [vmem:[%s342] sm:$0xff] %v1505
        %1510 = vst [vmem:[%s342 + $0x8] sm:$0xff] %v1506
      $region44: #{conv_lstm_cell_3d.1} parent=35 // pred_fallthru
        _
      %p1511 = scmp.lt.s32.totalorder %s22, 1
      %s1512 = scalar_select %p1511, %s22, 1
      %p1513 = scmp.lt.s32.totalorder %s23, 3
      %s1514 = scalar_select %p1513, %s23, 3
      %s1515 = smul.addr %s1514, 2
      %s1516 = smul.addr %s1512, 8
      %s1517 = sadd.s32 %s1515, %s1516
      %s1518 = smul.addr %s1517, 8
      %s1519 = scalar_lea.vmem %s4, %s1518
      %p1520 = scmp.lt.s32.totalorder %s22, 1
      %s1521 = scalar_select %p1520, %s22, 1
      %p1522 = scmp.lt.s32.totalorder %s23, 3
      %s1523 = scalar_select %p1522, %s23, 3
      %s1524 = smul.addr %s1523, 2
      %s1525 = smul.addr %s1521, 8
      %s1526 = sadd.s32 %s1524, %s1525
      %s1527 = smul.addr %s1526, 8
      %s1528 = scalar_lea.vmem %s5, %s1527
      // Predicated region
      $region45: #{conv_lstm_cell_3d.1} parent=35 // pred_check
        %p1529 = pneg %p161
      $region46: #{conv_lstm_cell_3d.1} parent=35 // pred_check_branch
        %1531 = sbr.rel (%p1529) target = $region48
      $region47: #{conv_lstm_cell_3d.1} parent=35 // pred_region
        _
      $region48: #{conv_lstm_cell_3d.1} parent=35 // pred_fallthru
        _
      // Predicated region
      $region49: #{conv_lstm_cell_3d.1} parent=35 // pred_check
        %p1532 = pneg %p189
      $region50: #{conv_lstm_cell_3d.1} parent=35 // pred_check_branch
        %1534 = sbr.rel (%p1532) target = $region52
      $region51: #{conv_lstm_cell_3d.1} parent=35 // pred_region
        _
      $region52: #{conv_lstm_cell_3d.1} parent=35 // pred_fallthru
        _
    $region36: #{conv_lstm_cell_3d.1} parent=5 // pred_fallthru
      _
    %p1535 = scmp.le.s32.totalorder 2, %s12
    // Predicated region
    $region53: #{conv_lstm_cell_3d.1} parent=5 // pred_check
      %p1536 = pneg %p1535
    $region54: #{conv_lstm_cell_3d.1} parent=5 // pred_check_branch
      %1538 = sbr.rel (%p1536) target = $region56
    $region55: #{conv_lstm_cell_3d.1} parent=5 // pred_region
      %s1539 = ssub.s32 %s12, 2
      // Predicated region
      $region57: #{conv_lstm_cell_3d.1} parent=55 // pred_check
        %p1540 = pneg %p167
      $region58: #{conv_lstm_cell_3d.1} parent=55 // pred_check_branch
        %1542 = sbr.rel (%p1540) target = $region60
      $region59: #{conv_lstm_cell_3d.1} parent=55 // pred_region
        %p1543 = scmp.lt.s32.totalorder %s25, 1
        %s1544 = scalar_select %p1543, %s25, 1
        %p1545 = scmp.lt.s32.totalorder %s26, 3
        %s1546 = scalar_select %p1545, %s26, 3
        %s1547 = smul.addr %s1546, 2
        %s1548 = smul.addr %s1544, 8
        %s1549 = sadd.s32 %s1547, %s1548
        %s1550 = smul.addr %s1549, 8
        %s1551 = scalar_lea.vmem %s4, %s1550
      $region60: #{conv_lstm_cell_3d.1} parent=55 // pred_fallthru
        _
      // Predicated region
      $region61: #{conv_lstm_cell_3d.1} parent=55 // pred_check
        %p1552 = pneg %p195
      $region62: #{conv_lstm_cell_3d.1} parent=55 // pred_check_branch
        %1554 = sbr.rel (%p1552) target = $region64
      $region63: #{conv_lstm_cell_3d.1} parent=55 // pred_region
        %p1555 = scmp.lt.s32.totalorder %s25, 1
        %s1556 = scalar_select %p1555, %s25, 1
        %p1557 = scmp.lt.s32.totalorder %s26, 3
        %s1558 = scalar_select %p1557, %s26, 3
        %s1559 = smul.addr %s1558, 2
        %s1560 = smul.addr %s1556, 8
        %s1561 = sadd.s32 %s1559, %s1560
        %s1562 = smul.addr %s1561, 8
        %s1563 = scalar_lea.vmem %s5, %s1562
      $region64: #{conv_lstm_cell_3d.1} parent=55 // pred_fallthru
        _
    $region56: #{conv_lstm_cell_3d.1} parent=5 // pred_fallthru
      _
  $region6: #{conv_lstm_cell_3d.1} parent=0 // loop_footer
    %s16 = sadd.s32 1, %s12
  $region7: #{conv_lstm_cell_3d.1} parent=0 // loop_footer_branch
    %11 = sbr.rel target = $region3
  $region8: #{conv_lstm_cell_3d.1} parent=0 // loop_exit
    _

</llo_original>
